<compile_context>
chip_gen: v7x
topology: tpu7x:2x2x1
jax: 0.10.0
libtpu: 0.0.40
codegen_flags: <defaults>
</compile_context>

<pallas_src>
import functools
import math

import jax
import jax.numpy as jnp
from jax.experimental import pallas as pl
from jax.experimental.pallas import tpu as pltpu


def _round_up(x, m):
    return (x + m - 1) // m * m


def _lora_conv2d_kernel(x_ref, wd_ref, wu_ref, o_ref, patch_ref, *,
                        kh, kw, sh, sw, th, wo):
    """One (batch n, row-tile t) grid step.

    x_ref    : (1, Hp, Wp, Cin)    zero-padded NHWC image for batch n (VMEM-resident
                                   across the row-tile axis; fetched once per image)
    wd_ref   : (kh*kw*Cin, rank)   down-proj weight as a single long-K matrix
    wu_ref   : (rank, Cp)          up-proj weight with the alpha/rank scale folded in
    o_ref    : (1, th*wo, Cp)      output rows of this tile (NHWC, H*W flattened)
    patch_ref: (th*wo, kh*kw*Cin)  VMEM scratch: im2col patch of this tile only
    """
    t = pl.program_id(1)
    cin = x_ref.shape[-1]
    cp = o_ref.shape[-1]
    m = th * wo

    row_base = t * (th * sh)
    if (th * sh) % 8 == 0:
        row_base = pl.multiple_of(row_base, 8)

    # ---- gather the kh*kw shifted taps of this tile into one (m, K) patch ----
    for i in range(kh):
        if sh == 1:
            row_idx = pl.ds(row_base + i, th)
        else:
            row_idx = pl.ds(row_base + i, th, stride=sh)
        for j in range(kw):
            if sw == 1:
                col_idx = pl.ds(j, wo)
            else:
                col_idx = pl.ds(j, wo, stride=sw)
            tap = i * kw + j
            slab = x_ref[0, row_idx, col_idx, :]                       # (th, wo, cin)
            patch_ref[:, tap * cin:(tap + 1) * cin] = slab.reshape(m, cin)

    # ---- down-proj: one long-K MXU dot, f32 accumulation inside the MXU ----
    down = jnp.dot(patch_ref[...], wd_ref[...],
                   preferred_element_type=jnp.float32)                 # (m, rank) f32
    # ---- up-proj on the weight-dtype (bf16) fast path; scale already folded in ----
    up = jnp.dot(down.astype(wu_ref.dtype), wu_ref[...],
                 preferred_element_type=jnp.float32)                   # (m, cp) f32
    o_ref[...] = up.astype(o_ref.dtype).reshape(1, m, cp)


def lora_conv2d_forward(x, w_down, w_up, *, stride=(1, 1), padding=(0, 0),
                        network_alpha=None, target_rows=512):
    """Pallas implementation of LoRAConv2dLayer.forward.

    x      : (N, Cin, H, W)          -- NCHW, like PyTorch
    w_down : (rank, Cin, kh, kw)     -- OIHW, like nn.Conv2d.weight
    w_up   : (Cout, rank, 1, 1)      -- OIHW
    returns: (N, Cout, Ho, Wo) in x.dtype
    """
    orig_dtype = x.dtype
    w_dtype = w_down.dtype

    N, Cin, H, W = x.shape
    rank, Cin_w, kh, kw = w_down.shape
    assert Cin == Cin_w
    Cout = w_up.shape[0]
    sh, sw = (stride, stride) if isinstance(stride, int) else tuple(stride)
    ph, pw = (padding, padding) if isinstance(padding, int) else tuple(padding)

    Ho = (H + 2 * ph - kh) // sh + 1
    Wo = (W + 2 * pw - kw) // sw + 1
    assert Ho > 0 and Wo > 0

    # ---- row tile: th output rows per step; (th*Wo) % 8 == 0 whenever th < Ho ----
    step = 8 // math.gcd(Wo, 8)
    th = max(step, (target_rows // max(Wo, 1)) // step * step)
    th = min(th, Ho)
    T = pl.cdiv(Ho, th)
    # TODO(synk): extremely wide feature maps would also want a column-tile grid axis.

    # ---- layout: NCHW -> zero-padded NHWC (single pass over x, no HBM im2col) ----
    Hp = max(H + 2 * ph, (T * th - 1) * sh + kh)   # extra rows so the (clipped)
    Wp = max(W + 2 * pw, (Wo - 1) * sw + kw)       # last tile never reads OOB
    x_nhwc = jnp.transpose(x, (0, 2, 3, 1)).astype(w_dtype)
    x_pad = jnp.pad(x_nhwc, ((0, 0), (ph, Hp - H - ph), (pw, Wp - W - pw), (0, 0)))
    # TODO(synk): for Cin < 128 / stride 1 a packed (N, Hp, Wp*Cin) minor dim would make
    #             the image DMA/VMEM lane-dense; kept NHWC here for stride generality.

    # ---- weights ----
    K = kh * kw * Cin
    # (rank, Cin, kh, kw) -> (kh, kw, Cin, rank) -> (K, rank): matches the patch K order.
    wd = jnp.transpose(w_down, (2, 3, 1, 0)).reshape(K, rank).astype(w_dtype)

    scale = float(network_alpha) / float(rank) if network_alpha is not None else 1.0
    # Pad Cout to a lane multiple only when cheap (<=1.25x bytes); otherwise keep the
    # exact Cout and accept a masked store instead of inflating output HBM writes.
    Cpad = _round_up(Cout, 128)
    Cp = Cpad if Cpad * 4 <= Cout * 5 else Cout
    wu = jnp.transpose(w_up.reshape(Cout, rank), (1, 0))               # (rank, Cout)
    wu = (wu.astype(jnp.float32) * scale).astype(w_dtype)              # fold alpha/rank
    wu = jnp.pad(wu, ((0, 0), (0, Cp - Cout)))                         # (rank, Cp)

    kernel = functools.partial(_lora_conv2d_kernel, kh=kh, kw=kw, sh=sh, sw=sw,
                               th=th, wo=Wo)

    # ---- VMEM budget / scheduler hints ----
    itemsize = jnp.dtype(w_dtype).itemsize
    out_itemsize = jnp.dtype(orig_dtype).itemsize
    m = th * Wo
    x_blk = Hp * _round_up(Wp, 8) * _round_up(Cin, 128) * itemsize
    patch_blk = _round_up(m, 8) * _round_up(K, 128) * itemsize
    o_blk = _round_up(m, 8) * _round_up(Cp, 128) * out_itemsize
    w_blk = (_round_up(K, 8) * _round_up(rank, 128)
             + _round_up(rank, 8) * _round_up(Cp, 128)) * itemsize
    f32_tmp = _round_up(m, 8) * (_round_up(rank, 128) + _round_up(Cp, 128)) * 4

    # Single-buffer the resident image when it dominates VMEM; its block index only
    # changes once per batch element, so the lost overlap is ~1/T of the image DMAs.
    single_buffer_image = x_blk > (8 << 20)
    x_bufs = 1 if single_buffer_image else 2
    est = x_bufs * x_blk + 2 * o_blk + 2 * w_blk + patch_blk + f32_tmp + (2 << 20)

    try:
        vmem_cap = pltpu.get_tpu_info().vmem_capacity_bytes   # 64 MiB/TC on v7x, 128 MiB on v5e/v6e
    except Exception:
        vmem_cap = 64 << 20
    vmem_limit = int(min(int(0.78 * vmem_cap), max(32 << 20, int(1.15 * est))))
    # TODO(synk): if one padded image still cannot fit (huge Cin*H*W on v7x), switch the
    #             image to memory_space=pl.ANY and manually double-buffer halo row bands.

    x_spec_kwargs = dict(pipeline_mode=pl.Buffered(1)) if single_buffer_image else {}
    in_specs = [
        # Full padded image per batch element; block index is constant over the row-tile
        # axis -> the HBM->VMEM image copy happens once per image.
        pl.BlockSpec((1, Hp, Wp, Cin), lambda n, t: (n, 0, 0, 0), **x_spec_kwargs),
        pl.BlockSpec((K, rank), lambda n, t: (0, 0)),
        pl.BlockSpec((rank, Cp), lambda n, t: (0, 0)),
    ]

    M_total = N * Ho * Wo
    flops = 2 * M_total * K * rank + 2 * M_total * rank * Cout
    bytes_accessed = int(x_pad.size * itemsize + N * Ho * Wo * Cp * out_itemsize
                         + (wd.size + wu.size) * itemsize)

    out = pl.pallas_call(
        kernel,
        out_shape=jax.ShapeDtypeStruct((N, Ho * Wo, Cp), orig_dtype),
        grid_spec=pltpu.PrefetchScalarGridSpec(
            num_scalar_prefetch=0,
            grid=(N, T),
            in_specs=in_specs,
            out_specs=pl.BlockSpec((1, th * Wo, Cp), lambda n, t: (n, t, 0)),
            scratch_shapes=[pltpu.VMEM((m, K), w_dtype)],
        ),
        compiler_params=pltpu.CompilerParams(
            # Every (n, t) output block is independent (no cross-step accumulator),
            # so both axes may shard across TensorCores (2 TCs on v7x).
            dimension_semantics=("parallel", "parallel"),
            vmem_limit_bytes=vmem_limit),
        cost_estimate=pl.CostEstimate(flops=flops, transcendentals=0,
                                      bytes_accessed=bytes_accessed),
    )(x_pad, wd, wu)

    if Cp != Cout:
        out = out[:, :, :Cout]
    out = out.reshape(N, Ho, Wo, Cout).transpose(0, 3, 1, 2)
    return out.astype(orig_dtype)


if __name__ == "__main__":
    key = jax.random.PRNGKey(0)
    k1, k2, k3 = jax.random.split(key, 3)

    # Small, conv-shaped example consistent with the module.
    N, Cin, H, W = 2, 4, 16, 16
    Cout, rank = 8, 4
    kh, kw = 3, 3
    stride = (1, 1)
    padding = (1, 1)
    network_alpha = 8.0

    x = jax.random.normal(k1, (N, Cin, H, W), dtype=jnp.float32)
    # down: nn.init.normal_(std = 1/rank)
    w_down = jax.random.normal(k2, (rank, Cin, kh, kw), dtype=jnp.float32) * (1.0 / rank)
    # NOTE: the PyTorch __init__ zero-inits the up weight (output would be all zeros);
    # a deterministic random value is used here so the kernel output is non-trivial.
    w_up = jax.random.normal(k3, (Cout, rank, 1, 1), dtype=jnp.float32) * 0.02

    out = lora_conv2d_forward(x, w_down, w_up, stride=stride, padding=padding,
                              network_alpha=network_alpha)
    jax.block_until_ready(out)

    # Pure-JAX reference (matches the PyTorch forward semantics).
    ref_down = jax.lax.conv_general_dilated(
        x, w_down, window_strides=stride,
        padding=[(padding[0], padding[0]), (padding[1], padding[1])],
        dimension_numbers=("NCHW", "OIHW", "NCHW"))
    ref_up = jax.lax.conv_general_dilated(
        ref_down, w_up, window_strides=(1, 1), padding="VALID",
        dimension_numbers=("NCHW", "OIHW", "NCHW"))
    ref = ref_up * (network_alpha / rank)

    assert out.shape == ref.shape, (out.shape, ref.shape)
    assert jnp.allclose(out, ref, atol=1e-4, rtol=1e-4), float(jnp.max(jnp.abs(out - ref)))

    print("KERNEL_OK")
</pallas_src>

<mosaic_0001>
module attributes {stable_mosaic.version = 11 : i64} {
  func.func @_lora_conv2d_kernel(%arg0: i32, %arg1: i32, %arg2: memref<1x18x18x4xf32, #tpu.memory_space<vmem>>, %arg3: memref<36x4xf32, #tpu.memory_space<vmem>>, %arg4: memref<4x8xf32, #tpu.memory_space<vmem>>, %arg5: memref<1x256x8xf32, #tpu.memory_space<vmem>>, %arg6: memref<256x36xf32, #tpu.memory_space<vmem>>) attributes {dimension_semantics = [#tpu.dimension_semantics<parallel>, #tpu.dimension_semantics<parallel>], iteration_bounds = array<i64: 2, 1>, scalar_prefetch = 0 : i64, scratch_operands = 1 : i64, tpu.core_type = #tpu.core_type<tc>, window_params = [{transform_indices = @transform_0, window_bounds = array<i64: 1, 18, 18, 4>}, {pipeline_mode = #tpu.pipeline_mode<synchronous>, transform_indices = @transform_1, window_bounds = array<i64: 36, 4>}, {pipeline_mode = #tpu.pipeline_mode<synchronous>, transform_indices = @transform_2, window_bounds = array<i64: 4, 8>}, {transform_indices = @transform_3, window_bounds = array<i64: 1, 256, 8>}]} {
    %c16_i32 = arith.constant 16 : i32
    %0 = arith.muli %arg1, %c16_i32 : i32
    %1 = tpu.assume_multiple %0, 8 : i32
    %c0_i32 = arith.constant 0 : i32
    %2 = arith.addi %1, %c0_i32 : i32
    %c0 = arith.constant 0 : index
    %3 = arith.index_cast %2 : i32 to index
    %c0_0 = arith.constant 0 : index
    %c0_1 = arith.constant 0 : index
    %4 = vector.load %arg2[%c0, %3, %c0_0, %c0_1] : memref<1x18x18x4xf32, #tpu.memory_space<vmem>>, vector<1x16x16x4xf32>
    %5 = vector.shape_cast %4 : vector<1x16x16x4xf32> to vector<16x16x4xf32>
    %6 = vector.shape_cast %5 : vector<16x16x4xf32> to vector<256x4xf32>
    %c0_2 = arith.constant 0 : index
    %c0_3 = arith.constant 0 : index
    %7 = vector.load %arg6[%c0_2, %c0_3] : memref<256x36xf32, #tpu.memory_space<vmem>>, vector<256x4xf32>
    tpu.vector_store %arg6[%c0_2, %c0_3], %6 {strides = array<i32>} : memref<256x36xf32, #tpu.memory_space<vmem>>, vector<256x4xf32>,
    %c0_4 = arith.constant 0 : index
    %8 = arith.index_cast %2 : i32 to index
    %c1 = arith.constant 1 : index
    %c0_5 = arith.constant 0 : index
    %9 = vector.load %arg2[%c0_4, %8, %c1, %c0_5] : memref<1x18x18x4xf32, #tpu.memory_space<vmem>>, vector<1x16x16x4xf32>
    %10 = vector.shape_cast %9 : vector<1x16x16x4xf32> to vector<16x16x4xf32>
    %11 = vector.shape_cast %10 : vector<16x16x4xf32> to vector<256x4xf32>
    %c0_6 = arith.constant 0 : index
    %c4 = arith.constant 4 : index
    %12 = vector.load %arg6[%c0_6, %c4] : memref<256x36xf32, #tpu.memory_space<vmem>>, vector<256x4xf32>
    tpu.vector_store %arg6[%c0_6, %c4], %11 {strides = array<i32>} : memref<256x36xf32, #tpu.memory_space<vmem>>, vector<256x4xf32>,
    %c0_7 = arith.constant 0 : index
    %13 = arith.index_cast %2 : i32 to index
    %c2 = arith.constant 2 : index
    %c0_8 = arith.constant 0 : index
    %14 = vector.load %arg2[%c0_7, %13, %c2, %c0_8] : memref<1x18x18x4xf32, #tpu.memory_space<vmem>>, vector<1x16x16x4xf32>
    %15 = vector.shape_cast %14 : vector<1x16x16x4xf32> to vector<16x16x4xf32>
    %16 = vector.shape_cast %15 : vector<16x16x4xf32> to vector<256x4xf32>
    %c0_9 = arith.constant 0 : index
    %c8 = arith.constant 8 : index
    %17 = vector.load %arg6[%c0_9, %c8] : memref<256x36xf32, #tpu.memory_space<vmem>>, vector<256x4xf32>
    tpu.vector_store %arg6[%c0_9, %c8], %16 {strides = array<i32>} : memref<256x36xf32, #tpu.memory_space<vmem>>, vector<256x4xf32>,
    %c1_i32 = arith.constant 1 : i32
    %18 = arith.addi %1, %c1_i32 : i32
    %c0_10 = arith.constant 0 : index
    %19 = arith.index_cast %18 : i32 to index
    %c0_11 = arith.constant 0 : index
    %c0_12 = arith.constant 0 : index
    %20 = vector.load %arg2[%c0_10, %19, %c0_11, %c0_12] : memref<1x18x18x4xf32, #tpu.memory_space<vmem>>, vector<1x16x16x4xf32>
    %21 = vector.shape_cast %20 : vector<1x16x16x4xf32> to vector<16x16x4xf32>
    %22 = vector.shape_cast %21 : vector<16x16x4xf32> to vector<256x4xf32>
    %c0_13 = arith.constant 0 : index
    %c12 = arith.constant 12 : index
    %23 = vector.load %arg6[%c0_13, %c12] : memref<256x36xf32, #tpu.memory_space<vmem>>, vector<256x4xf32>
    tpu.vector_store %arg6[%c0_13, %c12], %22 {strides = array<i32>} : memref<256x36xf32, #tpu.memory_space<vmem>>, vector<256x4xf32>,
    %c0_14 = arith.constant 0 : index
    %24 = arith.index_cast %18 : i32 to index
    %c1_15 = arith.constant 1 : index
    %c0_16 = arith.constant 0 : index
    %25 = vector.load %arg2[%c0_14, %24, %c1_15, %c0_16] : memref<1x18x18x4xf32, #tpu.memory_space<vmem>>, vector<1x16x16x4xf32>
    %26 = vector.shape_cast %25 : vector<1x16x16x4xf32> to vector<16x16x4xf32>
    %27 = vector.shape_cast %26 : vector<16x16x4xf32> to vector<256x4xf32>
    %c0_17 = arith.constant 0 : index
    %c16 = arith.constant 16 : index
    %28 = vector.load %arg6[%c0_17, %c16] : memref<256x36xf32, #tpu.memory_space<vmem>>, vector<256x4xf32>
    tpu.vector_store %arg6[%c0_17, %c16], %27 {strides = array<i32>} : memref<256x36xf32, #tpu.memory_space<vmem>>, vector<256x4xf32>,
    %c0_18 = arith.constant 0 : index
    %29 = arith.index_cast %18 : i32 to index
    %c2_19 = arith.constant 2 : index
    %c0_20 = arith.constant 0 : index
    %30 = vector.load %arg2[%c0_18, %29, %c2_19, %c0_20] : memref<1x18x18x4xf32, #tpu.memory_space<vmem>>, vector<1x16x16x4xf32>
    %31 = vector.shape_cast %30 : vector<1x16x16x4xf32> to vector<16x16x4xf32>
    %32 = vector.shape_cast %31 : vector<16x16x4xf32> to vector<256x4xf32>
    %c0_21 = arith.constant 0 : index
    %c20 = arith.constant 20 : index
    %33 = vector.load %arg6[%c0_21, %c20] : memref<256x36xf32, #tpu.memory_space<vmem>>, vector<256x4xf32>
    tpu.vector_store %arg6[%c0_21, %c20], %32 {strides = array<i32>} : memref<256x36xf32, #tpu.memory_space<vmem>>, vector<256x4xf32>,
    %c2_i32 = arith.constant 2 : i32
    %34 = arith.addi %1, %c2_i32 : i32
    %c0_22 = arith.constant 0 : index
    %35 = arith.index_cast %34 : i32 to index
    %c0_23 = arith.constant 0 : index
    %c0_24 = arith.constant 0 : index
    %36 = vector.load %arg2[%c0_22, %35, %c0_23, %c0_24] : memref<1x18x18x4xf32, #tpu.memory_space<vmem>>, vector<1x16x16x4xf32>
    %37 = vector.shape_cast %36 : vector<1x16x16x4xf32> to vector<16x16x4xf32>
    %38 = vector.shape_cast %37 : vector<16x16x4xf32> to vector<256x4xf32>
    %c0_25 = arith.constant 0 : index
    %c24 = arith.constant 24 : index
    %39 = vector.load %arg6[%c0_25, %c24] : memref<256x36xf32, #tpu.memory_space<vmem>>, vector<256x4xf32>
    tpu.vector_store %arg6[%c0_25, %c24], %38 {strides = array<i32>} : memref<256x36xf32, #tpu.memory_space<vmem>>, vector<256x4xf32>,
    %c0_26 = arith.constant 0 : index
    %40 = arith.index_cast %34 : i32 to index
    %c1_27 = arith.constant 1 : index
    %c0_28 = arith.constant 0 : index
    %41 = vector.load %arg2[%c0_26, %40, %c1_27, %c0_28] : memref<1x18x18x4xf32, #tpu.memory_space<vmem>>, vector<1x16x16x4xf32>
    %42 = vector.shape_cast %41 : vector<1x16x16x4xf32> to vector<16x16x4xf32>
    %43 = vector.shape_cast %42 : vector<16x16x4xf32> to vector<256x4xf32>
    %c0_29 = arith.constant 0 : index
    %c28 = arith.constant 28 : index
    %44 = vector.load %arg6[%c0_29, %c28] : memref<256x36xf32, #tpu.memory_space<vmem>>, vector<256x4xf32>
    tpu.vector_store %arg6[%c0_29, %c28], %43 {strides = array<i32>} : memref<256x36xf32, #tpu.memory_space<vmem>>, vector<256x4xf32>,
    %c0_30 = arith.constant 0 : index
    %45 = arith.index_cast %34 : i32 to index
    %c2_31 = arith.constant 2 : index
    %c0_32 = arith.constant 0 : index
    %46 = vector.load %arg2[%c0_30, %45, %c2_31, %c0_32] : memref<1x18x18x4xf32, #tpu.memory_space<vmem>>, vector<1x16x16x4xf32>
    %47 = vector.shape_cast %46 : vector<1x16x16x4xf32> to vector<16x16x4xf32>
    %48 = vector.shape_cast %47 : vector<16x16x4xf32> to vector<256x4xf32>
    %c0_33 = arith.constant 0 : index
    %c32 = arith.constant 32 : index
    %49 = vector.load %arg6[%c0_33, %c32] : memref<256x36xf32, #tpu.memory_space<vmem>>, vector<256x4xf32>
    tpu.vector_store %arg6[%c0_33, %c32], %48 {strides = array<i32>} : memref<256x36xf32, #tpu.memory_space<vmem>>, vector<256x4xf32>,
    %c0_34 = arith.constant 0 : index
    %c0_35 = arith.constant 0 : index
    %50 = vector.load %arg6[%c0_34, %c0_35] : memref<256x36xf32, #tpu.memory_space<vmem>>, vector<256x36xf32>
    %c0_36 = arith.constant 0 : index
    %c0_37 = arith.constant 0 : index
    %51 = vector.load %arg3[%c0_36, %c0_37] : memref<36x4xf32, #tpu.memory_space<vmem>>, vector<36x4xf32>
    %cst = arith.constant dense<0.000000e+00> : vector<256x4xf32>
    %52 = tpu.matmul %50, %51, %cst {dimension_numbers = #tpu.dot_dimension_numbers<[1], [0], [0], [1], [0, 0, 1, 1], [], []>} : vector<256x36xf32>, vector<36x4xf32>, vector<256x4xf32> -> vector<256x4xf32>
    %c0_38 = arith.constant 0 : index
    %c0_39 = arith.constant 0 : index
    %53 = vector.load %arg4[%c0_38, %c0_39] : memref<4x8xf32, #tpu.memory_space<vmem>>, vector<4x8xf32>
    %cst_40 = arith.constant dense<0.000000e+00> : vector<256x8xf32>
    %54 = tpu.matmul %52, %53, %cst_40 {dimension_numbers = #tpu.dot_dimension_numbers<[1], [0], [0], [1], [0, 0, 1, 1], [], []>} : vector<256x4xf32>, vector<4x8xf32>, vector<256x8xf32> -> vector<256x8xf32>
    %55 = vector.shape_cast %54 : vector<256x8xf32> to vector<1x256x8xf32>
    %c0_41 = arith.constant 0 : index
    %c0_42 = arith.constant 0 : index
    %c0_43 = arith.constant 0 : index
    %56 = vector.load %arg5[%c0_41, %c0_42, %c0_43] : memref<1x256x8xf32, #tpu.memory_space<vmem>>, vector<1x256x8xf32>
    tpu.vector_store %arg5[%c0_41, %c0_42, %c0_43], %55 {strides = array<i32>} : memref<1x256x8xf32, #tpu.memory_space<vmem>>, vector<1x256x8xf32>,
    return
  }
  func.func @transform_0(%arg0: i32, %arg1: i32) -> (i32, i32, i32, i32) {
    %c0_i32 = arith.constant 0 : i32
    %c0_i32_0 = arith.constant 0 : i32
    %c0_i32_1 = arith.constant 0 : i32
    %c0_i32_2 = arith.constant 0 : i32
    return %arg0, %c0_i32, %c0_i32_0, %c0_i32_1 : i32, i32, i32, i32
  }
  func.func @transform_1(%arg0: i32, %arg1: i32) -> (i32, i32) {
    %c0_i32 = arith.constant 0 : i32
    %c0_i32_0 = arith.constant 0 : i32
    %c0_i32_1 = arith.constant 0 : i32
    return %c0_i32, %c0_i32_0 : i32, i32
  }
  func.func @transform_2(%arg0: i32, %arg1: i32) -> (i32, i32) {
    %c0_i32 = arith.constant 0 : i32
    %c0_i32_0 = arith.constant 0 : i32
    %c0_i32_1 = arith.constant 0 : i32
    return %c0_i32, %c0_i32_0 : i32, i32
  }
  func.func @transform_3(%arg0: i32, %arg1: i32) -> (i32, i32, i32) {
    %c0_i32 = arith.constant 0 : i32
    %c0_i32_0 = arith.constant 0 : i32
    return %arg0, %arg1, %c0_i32 : i32, i32, i32
  }
}

</mosaic_0001>

<llo_original>
// kernel: tpu_custom_call.1
$region0: #{tpu_custom_call.1}
  #allocation0 [shape = 'u32[]', space=smem, size = 0x4, offset = 0x4, fixed_abs, tag = 'smem constant byte address 0x4 - core index']
  #allocation1 [shape = 'u32[144,128]{1,0:T(1,128)}', space=vmem, size = 0x12000, scoped, tag = 'internal scratch']
  #allocation2 [shape = 'f32[256,36]{1,0:T(8,128)}', space=vmem, size = 0x20000, scoped, tag = 'scratch operand']
  %s0 = inlined_call_operand.vmem [shape: f32[2,18,18,4], index: 0, kind: input, shape index: {}]
  %s1 = inlined_call_operand.vmem [shape: f32[36,4], index: 1, kind: input, shape index: {}]
  %s2 = inlined_call_operand.vmem [shape: f32[4,8], index: 2, kind: input, shape index: {}]
  %s3 = inlined_call_operand.vmem [shape: f32[2,256,8], index: 3, kind: output, shape index: {}]
  %s4 = sld [smem:[#allocation0]]
  $region45: #{tpu_custom_call.1} parent=0
    _
  %s6 = ssub.s32 1, %s4
  %s7 = scalar_select 0, %s6, %s4
  loop: start=0, step=1, limit=4
  $region2: #{tpu_custom_call.1} parent=0 // loop_pre_header
    _
  $region3: #{tpu_custom_call.1} parent=0 // loop_header
    %s9 = sphi 0, %s13
    %p10 = scmp.ge.s32.totalorder %s9, 4
    %s16 = sphi 0, %s28
    %s17 = sphi 0, %s24
    %s18 = sphi 0, %s16
    %s19 = sphi 0, %s17
    %s20 = sphi 0, %s18
    %s21 = sphi 0, %s19
    %s31 = sphi 0, %s33
    %s34 = sphi 0, %s31
    %s35 = sphi 0, %s34
    %s51 = sphi 0, %s35
    %s55 = sphi 0, %s55
    %s57 = sphi 0, %s55
    %s58 = sphi 0, %s57
    %s72 = sphi 0, %s58
    %s76 = sphi 0, %s76
    %s78 = sphi 0, %s76
    %s79 = sphi 0, %s78
    %s93 = sphi 0, %s79
    %s101 = sphi 0, %s103
    %s104 = sphi 0, %s101
    %s105 = sphi 0, %s104
    %s121 = sphi 0, %s105
  $region4: #{tpu_custom_call.1} parent=0 // loop_header_branch
    %12 = sbr.rel (%p10) target = $region8
  $region5: #{tpu_custom_call.1} parent=0 // loop_body
    %s14 = ssub.s32 %s9, 1
    %s15 = ssub.s32 %s9, 2
    %s22 = sadd.s32 1, %s17
    %p23 = scmp.ge.s32.totalorder %s22, 1
    %s24 = scalar_select %p23, 0, %s22
    %s25 = sadd.s32 1, %s16
    %s26 = scalar_select %p23, %s25, %s16
    %p27 = scmp.ge.s32.totalorder %s26, 2
    %s28 = scalar_select %p27, 0, %s26
    %s29 = ssub.s32 %s16, %s28
    %p30 = scmp.eq.s32.totalorder %s29, 0
    %s32 = sadd.s32 %s31, 1
    %s33 = scalar_select %p30, %s31, %s32
    %p36 = pneg %p30
    %p37 = scmp.eq.s32.totalorder %s9, 1
    %p38 = por %p36, %p37
    %p39 = scmp.ne.s32.totalorder %s31, %s34
    %p40 = scmp.eq.s32.totalorder %s9, 0
    %p41 = por %p39, %p40
    %p42 = scmp.ne.s32.totalorder %s31, %s34
    %p43 = scmp.eq.s32.totalorder %s14, 1
    %p44 = por %p42, %p43
    %p45 = scmp.ne.s32.totalorder %s34, %s35
    %p46 = scmp.eq.s32.totalorder %s14, 0
    %p47 = por %p45, %p46
    %p48 = scmp.ne.s32.totalorder %s34, %s35
    %p49 = scmp.eq.s32.totalorder %s15, 1
    %p50 = por %p48, %p49
    %p52 = scmp.ne.s32.totalorder %s35, %s51
    %p53 = scmp.eq.s32.totalorder %s15, 0
    %p54 = por %p52, %p53
    %s56 = sadd.s32 %s55, 1
    %p59 = scmp.eq.s32.totalorder %s9, 1
    %p60 = scmp.ne.s32.totalorder %s55, %s57
    %p61 = scmp.eq.s32.totalorder %s9, 0
    %p62 = por %p60, %p61
    %p63 = scmp.ne.s32.totalorder %s55, %s57
    %p64 = scmp.eq.s32.totalorder %s14, 1
    %p65 = por %p63, %p64
    %p66 = scmp.ne.s32.totalorder %s57, %s58
    %p67 = scmp.eq.s32.totalorder %s14, 0
    %p68 = por %p66, %p67
    %p69 = scmp.ne.s32.totalorder %s57, %s58
    %p70 = scmp.eq.s32.totalorder %s15, 1
    %p71 = por %p69, %p70
    %p73 = scmp.ne.s32.totalorder %s58, %s72
    %p74 = scmp.eq.s32.totalorder %s15, 0
    %p75 = por %p73, %p74
    %s77 = sadd.s32 %s76, 1
    %p80 = scmp.eq.s32.totalorder %s9, 1
    %p81 = scmp.ne.s32.totalorder %s76, %s78
    %p82 = scmp.eq.s32.totalorder %s9, 0
    %p83 = por %p81, %p82
    %p84 = scmp.ne.s32.totalorder %s76, %s78
    %p85 = scmp.eq.s32.totalorder %s14, 1
    %p86 = por %p84, %p85
    %p87 = scmp.ne.s32.totalorder %s78, %s79
    %p88 = scmp.eq.s32.totalorder %s14, 0
    %p89 = por %p87, %p88
    %p90 = scmp.ne.s32.totalorder %s78, %s79
    %p91 = scmp.eq.s32.totalorder %s15, 1
    %p92 = por %p90, %p91
    %p94 = scmp.ne.s32.totalorder %s79, %s93
    %p95 = scmp.eq.s32.totalorder %s15, 0
    %p96 = por %p94, %p95
    %s97 = ssub.s32 %s16, %s28
    %s98 = ssub.s32 %s17, %s24
    %s99 = sor.u32 %s97, %s98
    %p100 = scmp.eq.s32.totalorder %s99, 0
    %s102 = sadd.s32 %s101, 1
    %s103 = scalar_select %p100, %s101, %s102
    %p106 = pneg %p100
    %p107 = scmp.eq.s32.totalorder %s9, 1
    %p108 = por %p106, %p107
    %p109 = scmp.ne.s32.totalorder %s101, %s104
    %p110 = scmp.eq.s32.totalorder %s9, 0
    %p111 = por %p109, %p110
    %p112 = scmp.ne.s32.totalorder %s101, %s104
    %p113 = scmp.eq.s32.totalorder %s14, 1
    %p114 = por %p112, %p113
    %p115 = scmp.ne.s32.totalorder %s104, %s105
    %p116 = scmp.eq.s32.totalorder %s14, 0
    %p117 = por %p115, %p116
    %p118 = scmp.ne.s32.totalorder %s104, %s105
    %p119 = scmp.eq.s32.totalorder %s15, 1
    %p120 = por %p118, %p119
    %p122 = scmp.ne.s32.totalorder %s105, %s121
    %p123 = scmp.eq.s32.totalorder %s15, 0
    %p124 = por %p122, %p123
    %p125 = scmp.le.s32.totalorder 1, %s9
    %p126 = scmp.lt.s32.totalorder %s9, 3
    %p127 = pnand %p125, %p126
    %p128 = pneg %p127
    // Predicated region
    $region9: #{tpu_custom_call.1} parent=5 // pred_check
      _
    $region10: #{tpu_custom_call.1} parent=5 // pred_check_branch
      %130 = sbr.rel (%p127) target = $region12
    $region11: #{tpu_custom_call.1} parent=5 // pred_region
      %s131 = ssub.s32 %s9, 1
      // Predicated region
      $region13: #{tpu_custom_call.1} parent=11 // pred_check
        %p132 = pneg %p68
      $region14: #{tpu_custom_call.1} parent=11 // pred_check_branch
        %134 = sbr.rel (%p132) target = $region16
      $region15: #{tpu_custom_call.1} parent=11 // pred_region
        _
      $region16: #{tpu_custom_call.1} parent=11 // pred_fallthru
        _
      // Predicated region
      $region17: #{tpu_custom_call.1} parent=11 // pred_check
        %p135 = pneg %p89
      $region18: #{tpu_custom_call.1} parent=11 // pred_check_branch
        %137 = sbr.rel (%p135) target = $region20
      $region19: #{tpu_custom_call.1} parent=11 // pred_region
        _
      $region20: #{tpu_custom_call.1} parent=11 // pred_fallthru
        _
    $region12: #{tpu_custom_call.1} parent=5 // pred_fallthru
      _
    %p138 = scmp.lt.s32.totalorder %s9, 2
    // Predicated region
    $region21: #{tpu_custom_call.1} parent=5 // pred_check
      %p139 = pneg %p138
    $region22: #{tpu_custom_call.1} parent=5 // pred_check_branch
      %141 = sbr.rel (%p139) target = $region24
    $region23: #{tpu_custom_call.1} parent=5 // pred_region
      // Predicated region
      $region25: #{tpu_custom_call.1} parent=23 // pred_check
        %p142 = pneg %p41
      $region26: #{tpu_custom_call.1} parent=23 // pred_check_branch
        %144 = sbr.rel (%p142) target = $region28
      $region27: #{tpu_custom_call.1} parent=23 // pred_region
        %p145 = scmp.lt.s32.totalorder %s16, 1
        %s146 = scalar_select %p145, %s16, 1
        %s147 = smul.addr %s146, 54
        %s148 = smul.addr %s147, 8
        %s149 = scalar_lea.vmem %s0, %s148
      $region28: #{tpu_custom_call.1} parent=23 // pred_fallthru
        _
    $region24: #{tpu_custom_call.1} parent=5 // pred_fallthru
      _
    %p150 = scmp.le.s32.totalorder 1, %s9
    %p151 = scmp.lt.s32.totalorder %s9, 3
    %p152 = pnand %p150, %p151
    %p153 = pneg %p152
    // Predicated region
    $region29: #{tpu_custom_call.1} parent=5 // pred_check
      _
    $region30: #{tpu_custom_call.1} parent=5 // pred_check_branch
      %155 = sbr.rel (%p152) target = $region32
    $region31: #{tpu_custom_call.1} parent=5 // pred_region
      %s156 = ssub.s32 %s9, 1
      %p157 = scmp.lt.s32.totalorder %s18, 1
      %s158 = scalar_select %p157, %s18, 1
      %s159 = smul.addr %s158, 54
      %s160 = smul.addr %s159, 8
      %s161 = scalar_lea.vmem %s0, %s160
      %p162 = pneg %p47
      %p163 = pneg %p44
      %p164 = pneg %p68
      %p165 = pneg %p65
      %p166 = pneg %p89
      %p167 = pneg %p86
      %p168 = pneg %p117
      %p169 = pneg %p114
      %s170 = smul.u32 32, %s19
      %p171 = scmp.lt.s32.totalorder %s18, 1
      %s172 = scalar_select %p171, %s18, 1
      %p173 = scmp.lt.s32.totalorder %s170, 31
      %s174 = scalar_select %p173, %s170, 31
      %s175 = smul.addr %s172, 32
      %s176 = sadd.s32 %s174, %s175
      %s177 = smul.addr %s176, 8
      %s178 = scalar_lea.vmem %s3, %s177
      %p179 = scmp.lt.s32.totalorder %s18, 1
      %s180 = scalar_select %p179, %s18, 1
      %s181 = smul.addr %s180, 54
      %s182 = smul.addr %s181, 8
      %s183 = scalar_lea.vmem %s0, %s182
      %s184 = smul.u32 32, %s19
      %p185 = scmp.lt.s32.totalorder %s18, 1
      %s186 = scalar_select %p185, %s18, 1
      %p187 = scmp.lt.s32.totalorder %s184, 31
      %s188 = scalar_select %p187, %s184, 31
      %s189 = smul.addr %s186, 32
      %s190 = sadd.s32 %s188, %s189
      %s191 = smul.addr %s190, 8
      %s192 = scalar_lea.vmem %s3, %s191
      %s193 = smul.u32 32, %s19
      %s194 = smul.u32 %s19, 16
      %s195 = smul.u32 %s194, 24
      %s196 = scalar_lea.vmem %s183, %s195
      %v197 = vld [vmem:[%s196] sm:$0xff]
      %v198 = vld [vmem:[%s196 + $0x8] sm:$0xff]
      %v199 = vld [vmem:[%s196 + $0x18] sm:$0xff]
      %v200 = vld [vmem:[%s196 + $0x20] sm:$0xff]
      %v201 = vld [vmem:[%s196 + $0x30] sm:$0xff]
      %v202 = vld [vmem:[%s196 + $0x38] sm:$0xff]
      %v203 = vld [vmem:[%s196 + $0x48] sm:$0xff]
      %v204 = vld [vmem:[%s196 + $0x50] sm:$0xff]
      %v205 = vld [vmem:[%s196 + $0x60] sm:$0xff]
      %v206 = vld [vmem:[%s196 + $0x68] sm:$0xff]
      %v207 = vld [vmem:[%s196 + $0x78] sm:$0xff]
      %v208 = vld [vmem:[%s196 + $0x80] sm:$0xff]
      %v209 = vld [vmem:[%s196 + $0x90] sm:$0xff]
      %v210 = vld [vmem:[%s196 + $0x98] sm:$0xff]
      %v211 = vld [vmem:[%s196 + $0xa8] sm:$0xff]
      %v212 = vld [vmem:[%s196 + $0xb0] sm:$0xff]
      %v213 = vld [vmem:[%s196 + $0xc0] sm:$0xff]
      %v214 = vld [vmem:[%s196 + $0xc8] sm:$0xff]
      %v215 = vld [vmem:[%s196 + $0xd8] sm:$0xff]
      %v216 = vld [vmem:[%s196 + $0xe0] sm:$0xff]
      %v217 = vld [vmem:[%s196 + $0xf0] sm:$0xff]
      %v218 = vld [vmem:[%s196 + $0xf8] sm:$0xff]
      %v219 = vld [vmem:[%s196 + $0x108] sm:$0xff]
      %v220 = vld [vmem:[%s196 + $0x110] sm:$0xff]
      %v221 = vld [vmem:[%s196 + $0x120] sm:$0xff]
      %v222 = vld [vmem:[%s196 + $0x128] sm:$0xff]
      %v223 = vld [vmem:[%s196 + $0x138] sm:$0xff]
      %v224 = vld [vmem:[%s196 + $0x140] sm:$0xff]
      %v225 = vld [vmem:[%s196 + $0x150] sm:$0xff]
      %v226 = vld [vmem:[%s196 + $0x158] sm:$0xff]
      %v227 = vld [vmem:[%s196 + $0x168] sm:$0xff]
      %v228 = vld [vmem:[%s196 + $0x170] sm:$0xff]
      %vm229 = vcmask 31744
      %230 = vst.msk [vmem:[#allocation2] sm:$0xff] %vm229, %v197
      %231 = vst.msk [vmem:[#allocation2 + $0x8] sm:$0xff] %vm229, %v198
      %232 = vst.msk [vmem:[#allocation2 + $0x10] sm:$0xff] %vm229, %v199
      %233 = vst.msk [vmem:[#allocation2 + $0x18] sm:$0xff] %vm229, %v200
      %234 = vst.msk [vmem:[#allocation2 + $0x20] sm:$0xff] %vm229, %v201
      %235 = vst.msk [vmem:[#allocation2 + $0x28] sm:$0xff] %vm229, %v202
      %236 = vst.msk [vmem:[#allocation2 + $0x30] sm:$0xff] %vm229, %v203
      %237 = vst.msk [vmem:[#allocation2 + $0x38] sm:$0xff] %vm229, %v204
      %238 = vst.msk [vmem:[#allocation2 + $0x40] sm:$0xff] %vm229, %v205
      %239 = vst.msk [vmem:[#allocation2 + $0x48] sm:$0xff] %vm229, %v206
      %240 = vst.msk [vmem:[#allocation2 + $0x50] sm:$0xff] %vm229, %v207
      %241 = vst.msk [vmem:[#allocation2 + $0x58] sm:$0xff] %vm229, %v208
      %242 = vst.msk [vmem:[#allocation2 + $0x60] sm:$0xff] %vm229, %v209
      %243 = vst.msk [vmem:[#allocation2 + $0x68] sm:$0xff] %vm229, %v210
      %244 = vst.msk [vmem:[#allocation2 + $0x70] sm:$0xff] %vm229, %v211
      %245 = vst.msk [vmem:[#allocation2 + $0x78] sm:$0xff] %vm229, %v212
      %246 = vst.msk [vmem:[#allocation2 + $0x80] sm:$0xff] %vm229, %v213
      %247 = vst.msk [vmem:[#allocation2 + $0x88] sm:$0xff] %vm229, %v214
      %248 = vst.msk [vmem:[#allocation2 + $0x90] sm:$0xff] %vm229, %v215
      %249 = vst.msk [vmem:[#allocation2 + $0x98] sm:$0xff] %vm229, %v216
      %250 = vst.msk [vmem:[#allocation2 + $0xa0] sm:$0xff] %vm229, %v217
      %251 = vst.msk [vmem:[#allocation2 + $0xa8] sm:$0xff] %vm229, %v218
      %252 = vst.msk [vmem:[#allocation2 + $0xb0] sm:$0xff] %vm229, %v219
      %253 = vst.msk [vmem:[#allocation2 + $0xb8] sm:$0xff] %vm229, %v220
      %254 = vst.msk [vmem:[#allocation2 + $0xc0] sm:$0xff] %vm229, %v221
      %255 = vst.msk [vmem:[#allocation2 + $0xc8] sm:$0xff] %vm229, %v222
      %256 = vst.msk [vmem:[#allocation2 + $0xd0] sm:$0xff] %vm229, %v223
      %257 = vst.msk [vmem:[#allocation2 + $0xd8] sm:$0xff] %vm229, %v224
      %258 = vst.msk [vmem:[#allocation2 + $0xe0] sm:$0xff] %vm229, %v225
      %259 = vst.msk [vmem:[#allocation2 + $0xe8] sm:$0xff] %vm229, %v226
      %260 = vst.msk [vmem:[#allocation2 + $0xf0] sm:$0xff] %vm229, %v227
      %261 = vst.msk [vmem:[#allocation2 + $0xf8] sm:$0xff] %vm229, %v228
      %v262 = vld [vmem:[%s196 + $0x1] sm:$0xff]
      %v263 = vld [vmem:[%s196 + $0x9] sm:$0xff]
      %v264 = vld [vmem:[%s196 + $0x19] sm:$0xff]
      %v265 = vld [vmem:[%s196 + $0x21] sm:$0xff]
      %v266 = vld [vmem:[%s196 + $0x31] sm:$0xff]
      %v267 = vld [vmem:[%s196 + $0x39] sm:$0xff]
      %v268 = vld [vmem:[%s196 + $0x49] sm:$0xff]
      %v269 = vld [vmem:[%s196 + $0x51] sm:$0xff]
      %v270 = vld [vmem:[%s196 + $0x61] sm:$0xff]
      %v271 = vld [vmem:[%s196 + $0x69] sm:$0xff]
      %v272 = vld [vmem:[%s196 + $0x79] sm:$0xff]
      %v273 = vld [vmem:[%s196 + $0x81] sm:$0xff]
      %v274 = vld [vmem:[%s196 + $0x91] sm:$0xff]
      %v275 = vld [vmem:[%s196 + $0x99] sm:$0xff]
      %v276 = vld [vmem:[%s196 + $0xa9] sm:$0xff]
      %v277 = vld [vmem:[%s196 + $0xb1] sm:$0xff]
      %v278 = vld [vmem:[%s196 + $0xc1] sm:$0xff]
      %v279 = vld [vmem:[%s196 + $0xc9] sm:$0xff]
      %v280 = vld [vmem:[%s196 + $0xd9] sm:$0xff]
      %v281 = vld [vmem:[%s196 + $0xe1] sm:$0xff]
      %v282 = vld [vmem:[%s196 + $0xf1] sm:$0xff]
      %v283 = vld [vmem:[%s196 + $0xf9] sm:$0xff]
      %v284 = vld [vmem:[%s196 + $0x109] sm:$0xff]
      %v285 = vld [vmem:[%s196 + $0x111] sm:$0xff]
      %v286 = vld [vmem:[%s196 + $0x121] sm:$0xff]
      %v287 = vld [vmem:[%s196 + $0x129] sm:$0xff]
      %v288 = vld [vmem:[%s196 + $0x139] sm:$0xff]
      %v289 = vld [vmem:[%s196 + $0x141] sm:$0xff]
      %v290 = vld [vmem:[%s196 + $0x151] sm:$0xff]
      %v291 = vld [vmem:[%s196 + $0x159] sm:$0xff]
      %v292 = vld [vmem:[%s196 + $0x169] sm:$0xff]
      %v293 = vld [vmem:[%s196 + $0x171] sm:$0xff]
      %326 = vrot.lane.b32.xlu0 %v262, 4
      %v327 = vpop.permute.xlu0 %326
      %328 = vrot.lane.b32.xlu0 %v263, 4
      %v329 = vpop.permute.xlu0 %328
      %330 = vrot.lane.b32.xlu0 %v264, 4
      %v331 = vpop.permute.xlu0 %330
      %332 = vrot.lane.b32.xlu0 %v265, 4
      %v333 = vpop.permute.xlu0 %332
      %334 = vrot.lane.b32.xlu0 %v266, 4
      %v335 = vpop.permute.xlu0 %334
      %336 = vrot.lane.b32.xlu0 %v267, 4
      %v337 = vpop.permute.xlu0 %336
      %338 = vrot.lane.b32.xlu0 %v268, 4
      %v339 = vpop.permute.xlu0 %338
      %340 = vrot.lane.b32.xlu0 %v269, 4
      %v341 = vpop.permute.xlu0 %340
      %342 = vrot.lane.b32.xlu0 %v270, 4
      %v343 = vpop.permute.xlu0 %342
      %344 = vrot.lane.b32.xlu0 %v271, 4
      %v345 = vpop.permute.xlu0 %344
      %346 = vrot.lane.b32.xlu0 %v272, 4
      %v347 = vpop.permute.xlu0 %346
      %348 = vrot.lane.b32.xlu0 %v273, 4
      %v349 = vpop.permute.xlu0 %348
      %350 = vrot.lane.b32.xlu0 %v274, 4
      %v351 = vpop.permute.xlu0 %350
      %352 = vrot.lane.b32.xlu0 %v275, 4
      %v353 = vpop.permute.xlu0 %352
      %354 = vrot.lane.b32.xlu0 %v276, 4
      %v355 = vpop.permute.xlu0 %354
      %356 = vrot.lane.b32.xlu0 %v277, 4
      %v357 = vpop.permute.xlu0 %356
      %358 = vrot.lane.b32.xlu0 %v278, 4
      %v359 = vpop.permute.xlu0 %358
      %360 = vrot.lane.b32.xlu0 %v279, 4
      %v361 = vpop.permute.xlu0 %360
      %362 = vrot.lane.b32.xlu0 %v280, 4
      %v363 = vpop.permute.xlu0 %362
      %364 = vrot.lane.b32.xlu0 %v281, 4
      %v365 = vpop.permute.xlu0 %364
      %366 = vrot.lane.b32.xlu0 %v282, 4
      %v367 = vpop.permute.xlu0 %366
      %368 = vrot.lane.b32.xlu0 %v283, 4
      %v369 = vpop.permute.xlu0 %368
      %370 = vrot.lane.b32.xlu0 %v284, 4
      %v371 = vpop.permute.xlu0 %370
      %372 = vrot.lane.b32.xlu0 %v285, 4
      %v373 = vpop.permute.xlu0 %372
      %374 = vrot.lane.b32.xlu0 %v286, 4
      %v375 = vpop.permute.xlu0 %374
      %376 = vrot.lane.b32.xlu0 %v287, 4
      %v377 = vpop.permute.xlu0 %376
      %378 = vrot.lane.b32.xlu0 %v288, 4
      %v379 = vpop.permute.xlu0 %378
      %380 = vrot.lane.b32.xlu0 %v289, 4
      %v381 = vpop.permute.xlu0 %380
      %382 = vrot.lane.b32.xlu0 %v290, 4
      %v383 = vpop.permute.xlu0 %382
      %384 = vrot.lane.b32.xlu0 %v291, 4
      %v385 = vpop.permute.xlu0 %384
      %386 = vrot.lane.b32.xlu0 %v292, 4
      %v387 = vpop.permute.xlu0 %386
      %388 = vrot.lane.b32.xlu0 %v293, 4
      %v389 = vpop.permute.xlu0 %388
      %vm422 = vcmask 64544
      %423 = vst.msk [vmem:[#allocation2] sm:$0xff] %vm422, %v327
      %424 = vst.msk [vmem:[#allocation2 + $0x8] sm:$0xff] %vm422, %v329
      %425 = vst.msk [vmem:[#allocation2 + $0x10] sm:$0xff] %vm422, %v331
      %426 = vst.msk [vmem:[#allocation2 + $0x18] sm:$0xff] %vm422, %v333
      %427 = vst.msk [vmem:[#allocation2 + $0x20] sm:$0xff] %vm422, %v335
      %428 = vst.msk [vmem:[#allocation2 + $0x28] sm:$0xff] %vm422, %v337
      %429 = vst.msk [vmem:[#allocation2 + $0x30] sm:$0xff] %vm422, %v339
      %430 = vst.msk [vmem:[#allocation2 + $0x38] sm:$0xff] %vm422, %v341
      %431 = vst.msk [vmem:[#allocation2 + $0x40] sm:$0xff] %vm422, %v343
      %432 = vst.msk [vmem:[#allocation2 + $0x48] sm:$0xff] %vm422, %v345
      %433 = vst.msk [vmem:[#allocation2 + $0x50] sm:$0xff] %vm422, %v347
      %434 = vst.msk [vmem:[#allocation2 + $0x58] sm:$0xff] %vm422, %v349
      %435 = vst.msk [vmem:[#allocation2 + $0x60] sm:$0xff] %vm422, %v351
      %436 = vst.msk [vmem:[#allocation2 + $0x68] sm:$0xff] %vm422, %v353
      %437 = vst.msk [vmem:[#allocation2 + $0x70] sm:$0xff] %vm422, %v355
      %438 = vst.msk [vmem:[#allocation2 + $0x78] sm:$0xff] %vm422, %v357
      %439 = vst.msk [vmem:[#allocation2 + $0x80] sm:$0xff] %vm422, %v359
      %440 = vst.msk [vmem:[#allocation2 + $0x88] sm:$0xff] %vm422, %v361
      %441 = vst.msk [vmem:[#allocation2 + $0x90] sm:$0xff] %vm422, %v363
      %442 = vst.msk [vmem:[#allocation2 + $0x98] sm:$0xff] %vm422, %v365
      %443 = vst.msk [vmem:[#allocation2 + $0xa0] sm:$0xff] %vm422, %v367
      %444 = vst.msk [vmem:[#allocation2 + $0xa8] sm:$0xff] %vm422, %v369
      %445 = vst.msk [vmem:[#allocation2 + $0xb0] sm:$0xff] %vm422, %v371
      %446 = vst.msk [vmem:[#allocation2 + $0xb8] sm:$0xff] %vm422, %v373
      %447 = vst.msk [vmem:[#allocation2 + $0xc0] sm:$0xff] %vm422, %v375
      %448 = vst.msk [vmem:[#allocation2 + $0xc8] sm:$0xff] %vm422, %v377
      %449 = vst.msk [vmem:[#allocation2 + $0xd0] sm:$0xff] %vm422, %v379
      %450 = vst.msk [vmem:[#allocation2 + $0xd8] sm:$0xff] %vm422, %v381
      %451 = vst.msk [vmem:[#allocation2 + $0xe0] sm:$0xff] %vm422, %v383
      %452 = vst.msk [vmem:[#allocation2 + $0xe8] sm:$0xff] %vm422, %v385
      %453 = vst.msk [vmem:[#allocation2 + $0xf0] sm:$0xff] %vm422, %v387
      %454 = vst.msk [vmem:[#allocation2 + $0xf8] sm:$0xff] %vm422, %v389
      %v455 = vld [vmem:[%s196 + $0x2] sm:$0xff]
      %v456 = vld [vmem:[%s196 + $0xa] sm:$0xff]
      %v457 = vld [vmem:[%s196 + $0x1a] sm:$0xff]
      %v458 = vld [vmem:[%s196 + $0x22] sm:$0xff]
      %v459 = vld [vmem:[%s196 + $0x32] sm:$0xff]
      %v460 = vld [vmem:[%s196 + $0x3a] sm:$0xff]
      %v461 = vld [vmem:[%s196 + $0x4a] sm:$0xff]
      %v462 = vld [vmem:[%s196 + $0x52] sm:$0xff]
      %v463 = vld [vmem:[%s196 + $0x62] sm:$0xff]
      %v464 = vld [vmem:[%s196 + $0x6a] sm:$0xff]
      %v465 = vld [vmem:[%s196 + $0x7a] sm:$0xff]
      %v466 = vld [vmem:[%s196 + $0x82] sm:$0xff]
      %v467 = vld [vmem:[%s196 + $0x92] sm:$0xff]
      %v468 = vld [vmem:[%s196 + $0x9a] sm:$0xff]
      %v469 = vld [vmem:[%s196 + $0xaa] sm:$0xff]
      %v470 = vld [vmem:[%s196 + $0xb2] sm:$0xff]
      %v471 = vld [vmem:[%s196 + $0xc2] sm:$0xff]
      %v472 = vld [vmem:[%s196 + $0xca] sm:$0xff]
      %v473 = vld [vmem:[%s196 + $0xda] sm:$0xff]
      %v474 = vld [vmem:[%s196 + $0xe2] sm:$0xff]
      %v475 = vld [vmem:[%s196 + $0xf2] sm:$0xff]
      %v476 = vld [vmem:[%s196 + $0xfa] sm:$0xff]
      %v477 = vld [vmem:[%s196 + $0x10a] sm:$0xff]
      %v478 = vld [vmem:[%s196 + $0x112] sm:$0xff]
      %v479 = vld [vmem:[%s196 + $0x122] sm:$0xff]
      %v480 = vld [vmem:[%s196 + $0x12a] sm:$0xff]
      %v481 = vld [vmem:[%s196 + $0x13a] sm:$0xff]
      %v482 = vld [vmem:[%s196 + $0x142] sm:$0xff]
      %v483 = vld [vmem:[%s196 + $0x152] sm:$0xff]
      %v484 = vld [vmem:[%s196 + $0x15a] sm:$0xff]
      %v485 = vld [vmem:[%s196 + $0x16a] sm:$0xff]
      %v486 = vld [vmem:[%s196 + $0x172] sm:$0xff]
      %519 = vrot.lane.b32.xlu0 %v455, 8
      %v520 = vpop.permute.xlu0 %519
      %521 = vrot.lane.b32.xlu0 %v456, 8
      %v522 = vpop.permute.xlu0 %521
      %523 = vrot.lane.b32.xlu0 %v457, 8
      %v524 = vpop.permute.xlu0 %523
      %525 = vrot.lane.b32.xlu0 %v458, 8
      %v526 = vpop.permute.xlu0 %525
      %527 = vrot.lane.b32.xlu0 %v459, 8
      %v528 = vpop.permute.xlu0 %527
      %529 = vrot.lane.b32.xlu0 %v460, 8
      %v530 = vpop.permute.xlu0 %529
      %531 = vrot.lane.b32.xlu0 %v461, 8
      %v532 = vpop.permute.xlu0 %531
      %533 = vrot.lane.b32.xlu0 %v462, 8
      %v534 = vpop.permute.xlu0 %533
      %535 = vrot.lane.b32.xlu0 %v463, 8
      %v536 = vpop.permute.xlu0 %535
      %537 = vrot.lane.b32.xlu0 %v464, 8
      %v538 = vpop.permute.xlu0 %537
      %539 = vrot.lane.b32.xlu0 %v465, 8
      %v540 = vpop.permute.xlu0 %539
      %541 = vrot.lane.b32.xlu0 %v466, 8
      %v542 = vpop.permute.xlu0 %541
      %543 = vrot.lane.b32.xlu0 %v467, 8
      %v544 = vpop.permute.xlu0 %543
      %545 = vrot.lane.b32.xlu0 %v468, 8
      %v546 = vpop.permute.xlu0 %545
      %547 = vrot.lane.b32.xlu0 %v469, 8
      %v548 = vpop.permute.xlu0 %547
      %549 = vrot.lane.b32.xlu0 %v470, 8
      %v550 = vpop.permute.xlu0 %549
      %551 = vrot.lane.b32.xlu0 %v471, 8
      %v552 = vpop.permute.xlu0 %551
      %553 = vrot.lane.b32.xlu0 %v472, 8
      %v554 = vpop.permute.xlu0 %553
      %555 = vrot.lane.b32.xlu0 %v473, 8
      %v556 = vpop.permute.xlu0 %555
      %557 = vrot.lane.b32.xlu0 %v474, 8
      %v558 = vpop.permute.xlu0 %557
      %559 = vrot.lane.b32.xlu0 %v475, 8
      %v560 = vpop.permute.xlu0 %559
      %561 = vrot.lane.b32.xlu0 %v476, 8
      %v562 = vpop.permute.xlu0 %561
      %563 = vrot.lane.b32.xlu0 %v477, 8
      %v564 = vpop.permute.xlu0 %563
      %565 = vrot.lane.b32.xlu0 %v478, 8
      %v566 = vpop.permute.xlu0 %565
      %567 = vrot.lane.b32.xlu0 %v479, 8
      %v568 = vpop.permute.xlu0 %567
      %569 = vrot.lane.b32.xlu0 %v480, 8
      %v570 = vpop.permute.xlu0 %569
      %571 = vrot.lane.b32.xlu0 %v481, 8
      %v572 = vpop.permute.xlu0 %571
      %573 = vrot.lane.b32.xlu0 %v482, 8
      %v574 = vpop.permute.xlu0 %573
      %575 = vrot.lane.b32.xlu0 %v483, 8
      %v576 = vpop.permute.xlu0 %575
      %577 = vrot.lane.b32.xlu0 %v484, 8
      %v578 = vpop.permute.xlu0 %577
      %579 = vrot.lane.b32.xlu0 %v485, 8
      %v580 = vpop.permute.xlu0 %579
      %581 = vrot.lane.b32.xlu0 %v486, 8
      %v582 = vpop.permute.xlu0 %581
      %vm615 = vcmask 97344
      %616 = vst.msk [vmem:[#allocation2] sm:$0xff] %vm615, %v520
      %617 = vst.msk [vmem:[#allocation2 + $0x8] sm:$0xff] %vm615, %v522
      %618 = vst.msk [vmem:[#allocation2 + $0x10] sm:$0xff] %vm615, %v524
      %619 = vst.msk [vmem:[#allocation2 + $0x18] sm:$0xff] %vm615, %v526
      %620 = vst.msk [vmem:[#allocation2 + $0x20] sm:$0xff] %vm615, %v528
      %621 = vst.msk [vmem:[#allocation2 + $0x28] sm:$0xff] %vm615, %v530
      %622 = vst.msk [vmem:[#allocation2 + $0x30] sm:$0xff] %vm615, %v532
      %623 = vst.msk [vmem:[#allocation2 + $0x38] sm:$0xff] %vm615, %v534
      %624 = vst.msk [vmem:[#allocation2 + $0x40] sm:$0xff] %vm615, %v536
      %625 = vst.msk [vmem:[#allocation2 + $0x48] sm:$0xff] %vm615, %v538
      %626 = vst.msk [vmem:[#allocation2 + $0x50] sm:$0xff] %vm615, %v540
      %627 = vst.msk [vmem:[#allocation2 + $0x58] sm:$0xff] %vm615, %v542
      %628 = vst.msk [vmem:[#allocation2 + $0x60] sm:$0xff] %vm615, %v544
      %629 = vst.msk [vmem:[#allocation2 + $0x68] sm:$0xff] %vm615, %v546
      %630 = vst.msk [vmem:[#allocation2 + $0x70] sm:$0xff] %vm615, %v548
      %631 = vst.msk [vmem:[#allocation2 + $0x78] sm:$0xff] %vm615, %v550
      %632 = vst.msk [vmem:[#allocation2 + $0x80] sm:$0xff] %vm615, %v552
      %633 = vst.msk [vmem:[#allocation2 + $0x88] sm:$0xff] %vm615, %v554
      %634 = vst.msk [vmem:[#allocation2 + $0x90] sm:$0xff] %vm615, %v556
      %635 = vst.msk [vmem:[#allocation2 + $0x98] sm:$0xff] %vm615, %v558
      %636 = vst.msk [vmem:[#allocation2 + $0xa0] sm:$0xff] %vm615, %v560
      %637 = vst.msk [vmem:[#allocation2 + $0xa8] sm:$0xff] %vm615, %v562
      %638 = vst.msk [vmem:[#allocation2 + $0xb0] sm:$0xff] %vm615, %v564
      %639 = vst.msk [vmem:[#allocation2 + $0xb8] sm:$0xff] %vm615, %v566
      %640 = vst.msk [vmem:[#allocation2 + $0xc0] sm:$0xff] %vm615, %v568
      %641 = vst.msk [vmem:[#allocation2 + $0xc8] sm:$0xff] %vm615, %v570
      %642 = vst.msk [vmem:[#allocation2 + $0xd0] sm:$0xff] %vm615, %v572
      %643 = vst.msk [vmem:[#allocation2 + $0xd8] sm:$0xff] %vm615, %v574
      %644 = vst.msk [vmem:[#allocation2 + $0xe0] sm:$0xff] %vm615, %v576
      %645 = vst.msk [vmem:[#allocation2 + $0xe8] sm:$0xff] %vm615, %v578
      %646 = vst.msk [vmem:[#allocation2 + $0xf0] sm:$0xff] %vm615, %v580
      %647 = vst.msk [vmem:[#allocation2 + $0xf8] sm:$0xff] %vm615, %v582
      %s648 = sadd.s32 %s194, 1
      %s649 = smul.u32 %s648, 24
      %s650 = scalar_lea.vmem %s183, %s649
      %v651 = vld [vmem:[%s650] sm:$0xff]
      %v652 = vld [vmem:[%s650 + $0x8] sm:$0xff]
      %v653 = vld [vmem:[%s650 + $0x18] sm:$0xff]
      %v654 = vld [vmem:[%s650 + $0x20] sm:$0xff]
      %v655 = vld [vmem:[%s650 + $0x30] sm:$0xff]
      %v656 = vld [vmem:[%s650 + $0x38] sm:$0xff]
      %v657 = vld [vmem:[%s650 + $0x48] sm:$0xff]
      %v658 = vld [vmem:[%s650 + $0x50] sm:$0xff]
      %v659 = vld [vmem:[%s650 + $0x60] sm:$0xff]
      %v660 = vld [vmem:[%s650 + $0x68] sm:$0xff]
      %v661 = vld [vmem:[%s650 + $0x78] sm:$0xff]
      %v662 = vld [vmem:[%s650 + $0x80] sm:$0xff]
      %v663 = vld [vmem:[%s650 + $0x90] sm:$0xff]
      %v664 = vld [vmem:[%s650 + $0x98] sm:$0xff]
      %v665 = vld [vmem:[%s650 + $0xa8] sm:$0xff]
      %v666 = vld [vmem:[%s650 + $0xb0] sm:$0xff]
      %v667 = vld [vmem:[%s650 + $0xc0] sm:$0xff]
      %v668 = vld [vmem:[%s650 + $0xc8] sm:$0xff]
      %v669 = vld [vmem:[%s650 + $0xd8] sm:$0xff]
      %v670 = vld [vmem:[%s650 + $0xe0] sm:$0xff]
      %v671 = vld [vmem:[%s650 + $0xf0] sm:$0xff]
      %v672 = vld [vmem:[%s650 + $0xf8] sm:$0xff]
      %v673 = vld [vmem:[%s650 + $0x108] sm:$0xff]
      %v674 = vld [vmem:[%s650 + $0x110] sm:$0xff]
      %v675 = vld [vmem:[%s650 + $0x120] sm:$0xff]
      %v676 = vld [vmem:[%s650 + $0x128] sm:$0xff]
      %v677 = vld [vmem:[%s650 + $0x138] sm:$0xff]
      %v678 = vld [vmem:[%s650 + $0x140] sm:$0xff]
      %v679 = vld [vmem:[%s650 + $0x150] sm:$0xff]
      %v680 = vld [vmem:[%s650 + $0x158] sm:$0xff]
      %v681 = vld [vmem:[%s650 + $0x168] sm:$0xff]
      %v682 = vld [vmem:[%s650 + $0x170] sm:$0xff]
      %715 = vrot.lane.b32.xlu0 %v651, 12
      %v716 = vpop.permute.xlu0 %715
      %717 = vrot.lane.b32.xlu0 %v652, 12
      %v718 = vpop.permute.xlu0 %717
      %719 = vrot.lane.b32.xlu0 %v653, 12
      %v720 = vpop.permute.xlu0 %719
      %721 = vrot.lane.b32.xlu0 %v654, 12
      %v722 = vpop.permute.xlu0 %721
      %723 = vrot.lane.b32.xlu0 %v655, 12
      %v724 = vpop.permute.xlu0 %723
      %725 = vrot.lane.b32.xlu0 %v656, 12
      %v726 = vpop.permute.xlu0 %725
      %727 = vrot.lane.b32.xlu0 %v657, 12
      %v728 = vpop.permute.xlu0 %727
      %729 = vrot.lane.b32.xlu0 %v658, 12
      %v730 = vpop.permute.xlu0 %729
      %731 = vrot.lane.b32.xlu0 %v659, 12
      %v732 = vpop.permute.xlu0 %731
      %733 = vrot.lane.b32.xlu0 %v660, 12
      %v734 = vpop.permute.xlu0 %733
      %735 = vrot.lane.b32.xlu0 %v661, 12
      %v736 = vpop.permute.xlu0 %735
      %737 = vrot.lane.b32.xlu0 %v662, 12
      %v738 = vpop.permute.xlu0 %737
      %739 = vrot.lane.b32.xlu0 %v663, 12
      %v740 = vpop.permute.xlu0 %739
      %741 = vrot.lane.b32.xlu0 %v664, 12
      %v742 = vpop.permute.xlu0 %741
      %743 = vrot.lane.b32.xlu0 %v665, 12
      %v744 = vpop.permute.xlu0 %743
      %745 = vrot.lane.b32.xlu0 %v666, 12
      %v746 = vpop.permute.xlu0 %745
      %747 = vrot.lane.b32.xlu0 %v667, 12
      %v748 = vpop.permute.xlu0 %747
      %749 = vrot.lane.b32.xlu0 %v668, 12
      %v750 = vpop.permute.xlu0 %749
      %751 = vrot.lane.b32.xlu0 %v669, 12
      %v752 = vpop.permute.xlu0 %751
      %753 = vrot.lane.b32.xlu0 %v670, 12
      %v754 = vpop.permute.xlu0 %753
      %755 = vrot.lane.b32.xlu0 %v671, 12
      %v756 = vpop.permute.xlu0 %755
      %757 = vrot.lane.b32.xlu0 %v672, 12
      %v758 = vpop.permute.xlu0 %757
      %759 = vrot.lane.b32.xlu0 %v673, 12
      %v760 = vpop.permute.xlu0 %759
      %761 = vrot.lane.b32.xlu0 %v674, 12
      %v762 = vpop.permute.xlu0 %761
      %763 = vrot.lane.b32.xlu0 %v675, 12
      %v764 = vpop.permute.xlu0 %763
      %765 = vrot.lane.b32.xlu0 %v676, 12
      %v766 = vpop.permute.xlu0 %765
      %767 = vrot.lane.b32.xlu0 %v677, 12
      %v768 = vpop.permute.xlu0 %767
      %769 = vrot.lane.b32.xlu0 %v678, 12
      %v770 = vpop.permute.xlu0 %769
      %771 = vrot.lane.b32.xlu0 %v679, 12
      %v772 = vpop.permute.xlu0 %771
      %773 = vrot.lane.b32.xlu0 %v680, 12
      %v774 = vpop.permute.xlu0 %773
      %775 = vrot.lane.b32.xlu0 %v681, 12
      %v776 = vpop.permute.xlu0 %775
      %777 = vrot.lane.b32.xlu0 %v682, 12
      %v778 = vpop.permute.xlu0 %777
      %vm811 = vcmask 130144
      %812 = vst.msk [vmem:[#allocation2] sm:$0xff] %vm811, %v716
      %813 = vst.msk [vmem:[#allocation2 + $0x8] sm:$0xff] %vm811, %v718
      %814 = vst.msk [vmem:[#allocation2 + $0x10] sm:$0xff] %vm811, %v720
      %815 = vst.msk [vmem:[#allocation2 + $0x18] sm:$0xff] %vm811, %v722
      %816 = vst.msk [vmem:[#allocation2 + $0x20] sm:$0xff] %vm811, %v724
      %817 = vst.msk [vmem:[#allocation2 + $0x28] sm:$0xff] %vm811, %v726
      %818 = vst.msk [vmem:[#allocation2 + $0x30] sm:$0xff] %vm811, %v728
      %819 = vst.msk [vmem:[#allocation2 + $0x38] sm:$0xff] %vm811, %v730
      %820 = vst.msk [vmem:[#allocation2 + $0x40] sm:$0xff] %vm811, %v732
      %821 = vst.msk [vmem:[#allocation2 + $0x48] sm:$0xff] %vm811, %v734
      %822 = vst.msk [vmem:[#allocation2 + $0x50] sm:$0xff] %vm811, %v736
      %823 = vst.msk [vmem:[#allocation2 + $0x58] sm:$0xff] %vm811, %v738
      %824 = vst.msk [vmem:[#allocation2 + $0x60] sm:$0xff] %vm811, %v740
      %825 = vst.msk [vmem:[#allocation2 + $0x68] sm:$0xff] %vm811, %v742
      %826 = vst.msk [vmem:[#allocation2 + $0x70] sm:$0xff] %vm811, %v744
      %827 = vst.msk [vmem:[#allocation2 + $0x78] sm:$0xff] %vm811, %v746
      %828 = vst.msk [vmem:[#allocation2 + $0x80] sm:$0xff] %vm811, %v748
      %829 = vst.msk [vmem:[#allocation2 + $0x88] sm:$0xff] %vm811, %v750
      %830 = vst.msk [vmem:[#allocation2 + $0x90] sm:$0xff] %vm811, %v752
      %831 = vst.msk [vmem:[#allocation2 + $0x98] sm:$0xff] %vm811, %v754
      %832 = vst.msk [vmem:[#allocation2 + $0xa0] sm:$0xff] %vm811, %v756
      %833 = vst.msk [vmem:[#allocation2 + $0xa8] sm:$0xff] %vm811, %v758
      %834 = vst.msk [vmem:[#allocation2 + $0xb0] sm:$0xff] %vm811, %v760
      %835 = vst.msk [vmem:[#allocation2 + $0xb8] sm:$0xff] %vm811, %v762
      %836 = vst.msk [vmem:[#allocation2 + $0xc0] sm:$0xff] %vm811, %v764
      %837 = vst.msk [vmem:[#allocation2 + $0xc8] sm:$0xff] %vm811, %v766
      %838 = vst.msk [vmem:[#allocation2 + $0xd0] sm:$0xff] %vm811, %v768
      %839 = vst.msk [vmem:[#allocation2 + $0xd8] sm:$0xff] %vm811, %v770
      %840 = vst.msk [vmem:[#allocation2 + $0xe0] sm:$0xff] %vm811, %v772
      %841 = vst.msk [vmem:[#allocation2 + $0xe8] sm:$0xff] %vm811, %v774
      %842 = vst.msk [vmem:[#allocation2 + $0xf0] sm:$0xff] %vm811, %v776
      %843 = vst.msk [vmem:[#allocation2 + $0xf8] sm:$0xff] %vm811, %v778
      %v844 = vld [vmem:[%s650 + $0x1] sm:$0xff]
      %v845 = vld [vmem:[%s650 + $0x9] sm:$0xff]
      %v846 = vld [vmem:[%s650 + $0x19] sm:$0xff]
      %v847 = vld [vmem:[%s650 + $0x21] sm:$0xff]
      %v848 = vld [vmem:[%s650 + $0x31] sm:$0xff]
      %v849 = vld [vmem:[%s650 + $0x39] sm:$0xff]
      %v850 = vld [vmem:[%s650 + $0x49] sm:$0xff]
      %v851 = vld [vmem:[%s650 + $0x51] sm:$0xff]
      %v852 = vld [vmem:[%s650 + $0x61] sm:$0xff]
      %v853 = vld [vmem:[%s650 + $0x69] sm:$0xff]
      %v854 = vld [vmem:[%s650 + $0x79] sm:$0xff]
      %v855 = vld [vmem:[%s650 + $0x81] sm:$0xff]
      %v856 = vld [vmem:[%s650 + $0x91] sm:$0xff]
      %v857 = vld [vmem:[%s650 + $0x99] sm:$0xff]
      %v858 = vld [vmem:[%s650 + $0xa9] sm:$0xff]
      %v859 = vld [vmem:[%s650 + $0xb1] sm:$0xff]
      %v860 = vld [vmem:[%s650 + $0xc1] sm:$0xff]
      %v861 = vld [vmem:[%s650 + $0xc9] sm:$0xff]
      %v862 = vld [vmem:[%s650 + $0xd9] sm:$0xff]
      %v863 = vld [vmem:[%s650 + $0xe1] sm:$0xff]
      %v864 = vld [vmem:[%s650 + $0xf1] sm:$0xff]
      %v865 = vld [vmem:[%s650 + $0xf9] sm:$0xff]
      %v866 = vld [vmem:[%s650 + $0x109] sm:$0xff]
      %v867 = vld [vmem:[%s650 + $0x111] sm:$0xff]
      %v868 = vld [vmem:[%s650 + $0x121] sm:$0xff]
      %v869 = vld [vmem:[%s650 + $0x129] sm:$0xff]
      %v870 = vld [vmem:[%s650 + $0x139] sm:$0xff]
      %v871 = vld [vmem:[%s650 + $0x141] sm:$0xff]
      %v872 = vld [vmem:[%s650 + $0x151] sm:$0xff]
      %v873 = vld [vmem:[%s650 + $0x159] sm:$0xff]
      %v874 = vld [vmem:[%s650 + $0x169] sm:$0xff]
      %v875 = vld [vmem:[%s650 + $0x171] sm:$0xff]
      %908 = vrot.lane.b32.xlu0 %v844, 16
      %v909 = vpop.permute.xlu0 %908
      %910 = vrot.lane.b32.xlu0 %v845, 16
      %v911 = vpop.permute.xlu0 %910
      %912 = vrot.lane.b32.xlu0 %v846, 16
      %v913 = vpop.permute.xlu0 %912
      %914 = vrot.lane.b32.xlu0 %v847, 16
      %v915 = vpop.permute.xlu0 %914
      %916 = vrot.lane.b32.xlu0 %v848, 16
      %v917 = vpop.permute.xlu0 %916
      %918 = vrot.lane.b32.xlu0 %v849, 16
      %v919 = vpop.permute.xlu0 %918
      %920 = vrot.lane.b32.xlu0 %v850, 16
      %v921 = vpop.permute.xlu0 %920
      %922 = vrot.lane.b32.xlu0 %v851, 16
      %v923 = vpop.permute.xlu0 %922
      %924 = vrot.lane.b32.xlu0 %v852, 16
      %v925 = vpop.permute.xlu0 %924
      %926 = vrot.lane.b32.xlu0 %v853, 16
      %v927 = vpop.permute.xlu0 %926
      %928 = vrot.lane.b32.xlu0 %v854, 16
      %v929 = vpop.permute.xlu0 %928
      %930 = vrot.lane.b32.xlu0 %v855, 16
      %v931 = vpop.permute.xlu0 %930
      %932 = vrot.lane.b32.xlu0 %v856, 16
      %v933 = vpop.permute.xlu0 %932
      %934 = vrot.lane.b32.xlu0 %v857, 16
      %v935 = vpop.permute.xlu0 %934
      %936 = vrot.lane.b32.xlu0 %v858, 16
      %v937 = vpop.permute.xlu0 %936
      %938 = vrot.lane.b32.xlu0 %v859, 16
      %v939 = vpop.permute.xlu0 %938
      %940 = vrot.lane.b32.xlu0 %v860, 16
      %v941 = vpop.permute.xlu0 %940
      %942 = vrot.lane.b32.xlu0 %v861, 16
      %v943 = vpop.permute.xlu0 %942
      %944 = vrot.lane.b32.xlu0 %v862, 16
      %v945 = vpop.permute.xlu0 %944
      %946 = vrot.lane.b32.xlu0 %v863, 16
      %v947 = vpop.permute.xlu0 %946
      %948 = vrot.lane.b32.xlu0 %v864, 16
      %v949 = vpop.permute.xlu0 %948
      %950 = vrot.lane.b32.xlu0 %v865, 16
      %v951 = vpop.permute.xlu0 %950
      %952 = vrot.lane.b32.xlu0 %v866, 16
      %v953 = vpop.permute.xlu0 %952
      %954 = vrot.lane.b32.xlu0 %v867, 16
      %v955 = vpop.permute.xlu0 %954
      %956 = vrot.lane.b32.xlu0 %v868, 16
      %v957 = vpop.permute.xlu0 %956
      %958 = vrot.lane.b32.xlu0 %v869, 16
      %v959 = vpop.permute.xlu0 %958
      %960 = vrot.lane.b32.xlu0 %v870, 16
      %v961 = vpop.permute.xlu0 %960
      %962 = vrot.lane.b32.xlu0 %v871, 16
      %v963 = vpop.permute.xlu0 %962
      %964 = vrot.lane.b32.xlu0 %v872, 16
      %v965 = vpop.permute.xlu0 %964
      %966 = vrot.lane.b32.xlu0 %v873, 16
      %v967 = vpop.permute.xlu0 %966
      %968 = vrot.lane.b32.xlu0 %v874, 16
      %v969 = vpop.permute.xlu0 %968
      %970 = vrot.lane.b32.xlu0 %v875, 16
      %v971 = vpop.permute.xlu0 %970
      %vm1004 = vcmask 162944
      %1005 = vst.msk [vmem:[#allocation2] sm:$0xff] %vm1004, %v909
      %1006 = vst.msk [vmem:[#allocation2 + $0x8] sm:$0xff] %vm1004, %v911
      %1007 = vst.msk [vmem:[#allocation2 + $0x10] sm:$0xff] %vm1004, %v913
      %1008 = vst.msk [vmem:[#allocation2 + $0x18] sm:$0xff] %vm1004, %v915
      %1009 = vst.msk [vmem:[#allocation2 + $0x20] sm:$0xff] %vm1004, %v917
      %1010 = vst.msk [vmem:[#allocation2 + $0x28] sm:$0xff] %vm1004, %v919
      %1011 = vst.msk [vmem:[#allocation2 + $0x30] sm:$0xff] %vm1004, %v921
      %1012 = vst.msk [vmem:[#allocation2 + $0x38] sm:$0xff] %vm1004, %v923
      %1013 = vst.msk [vmem:[#allocation2 + $0x40] sm:$0xff] %vm1004, %v925
      %1014 = vst.msk [vmem:[#allocation2 + $0x48] sm:$0xff] %vm1004, %v927
      %1015 = vst.msk [vmem:[#allocation2 + $0x50] sm:$0xff] %vm1004, %v929
      %1016 = vst.msk [vmem:[#allocation2 + $0x58] sm:$0xff] %vm1004, %v931
      %1017 = vst.msk [vmem:[#allocation2 + $0x60] sm:$0xff] %vm1004, %v933
      %1018 = vst.msk [vmem:[#allocation2 + $0x68] sm:$0xff] %vm1004, %v935
      %1019 = vst.msk [vmem:[#allocation2 + $0x70] sm:$0xff] %vm1004, %v937
      %1020 = vst.msk [vmem:[#allocation2 + $0x78] sm:$0xff] %vm1004, %v939
      %1021 = vst.msk [vmem:[#allocation2 + $0x80] sm:$0xff] %vm1004, %v941
      %1022 = vst.msk [vmem:[#allocation2 + $0x88] sm:$0xff] %vm1004, %v943
      %1023 = vst.msk [vmem:[#allocation2 + $0x90] sm:$0xff] %vm1004, %v945
      %1024 = vst.msk [vmem:[#allocation2 + $0x98] sm:$0xff] %vm1004, %v947
      %1025 = vst.msk [vmem:[#allocation2 + $0xa0] sm:$0xff] %vm1004, %v949
      %1026 = vst.msk [vmem:[#allocation2 + $0xa8] sm:$0xff] %vm1004, %v951
      %1027 = vst.msk [vmem:[#allocation2 + $0xb0] sm:$0xff] %vm1004, %v953
      %1028 = vst.msk [vmem:[#allocation2 + $0xb8] sm:$0xff] %vm1004, %v955
      %1029 = vst.msk [vmem:[#allocation2 + $0xc0] sm:$0xff] %vm1004, %v957
      %1030 = vst.msk [vmem:[#allocation2 + $0xc8] sm:$0xff] %vm1004, %v959
      %1031 = vst.msk [vmem:[#allocation2 + $0xd0] sm:$0xff] %vm1004, %v961
      %1032 = vst.msk [vmem:[#allocation2 + $0xd8] sm:$0xff] %vm1004, %v963
      %1033 = vst.msk [vmem:[#allocation2 + $0xe0] sm:$0xff] %vm1004, %v965
      %1034 = vst.msk [vmem:[#allocation2 + $0xe8] sm:$0xff] %vm1004, %v967
      %1035 = vst.msk [vmem:[#allocation2 + $0xf0] sm:$0xff] %vm1004, %v969
      %1036 = vst.msk [vmem:[#allocation2 + $0xf8] sm:$0xff] %vm1004, %v971
      %v1037 = vld [vmem:[%s650 + $0x2] sm:$0xff]
      %v1038 = vld [vmem:[%s650 + $0xa] sm:$0xff]
      %v1039 = vld [vmem:[%s650 + $0x1a] sm:$0xff]
      %v1040 = vld [vmem:[%s650 + $0x22] sm:$0xff]
      %v1041 = vld [vmem:[%s650 + $0x32] sm:$0xff]
      %v1042 = vld [vmem:[%s650 + $0x3a] sm:$0xff]
      %v1043 = vld [vmem:[%s650 + $0x4a] sm:$0xff]
      %v1044 = vld [vmem:[%s650 + $0x52] sm:$0xff]
      %v1045 = vld [vmem:[%s650 + $0x62] sm:$0xff]
      %v1046 = vld [vmem:[%s650 + $0x6a] sm:$0xff]
      %v1047 = vld [vmem:[%s650 + $0x7a] sm:$0xff]
      %v1048 = vld [vmem:[%s650 + $0x82] sm:$0xff]
      %v1049 = vld [vmem:[%s650 + $0x92] sm:$0xff]
      %v1050 = vld [vmem:[%s650 + $0x9a] sm:$0xff]
      %v1051 = vld [vmem:[%s650 + $0xaa] sm:$0xff]
      %v1052 = vld [vmem:[%s650 + $0xb2] sm:$0xff]
      %v1053 = vld [vmem:[%s650 + $0xc2] sm:$0xff]
      %v1054 = vld [vmem:[%s650 + $0xca] sm:$0xff]
      %v1055 = vld [vmem:[%s650 + $0xda] sm:$0xff]
      %v1056 = vld [vmem:[%s650 + $0xe2] sm:$0xff]
      %v1057 = vld [vmem:[%s650 + $0xf2] sm:$0xff]
      %v1058 = vld [vmem:[%s650 + $0xfa] sm:$0xff]
      %v1059 = vld [vmem:[%s650 + $0x10a] sm:$0xff]
      %v1060 = vld [vmem:[%s650 + $0x112] sm:$0xff]
      %v1061 = vld [vmem:[%s650 + $0x122] sm:$0xff]
      %v1062 = vld [vmem:[%s650 + $0x12a] sm:$0xff]
      %v1063 = vld [vmem:[%s650 + $0x13a] sm:$0xff]
      %v1064 = vld [vmem:[%s650 + $0x142] sm:$0xff]
      %v1065 = vld [vmem:[%s650 + $0x152] sm:$0xff]
      %v1066 = vld [vmem:[%s650 + $0x15a] sm:$0xff]
      %v1067 = vld [vmem:[%s650 + $0x16a] sm:$0xff]
      %v1068 = vld [vmem:[%s650 + $0x172] sm:$0xff]
      %1101 = vrot.lane.b32.xlu0 %v1037, 20
      %v1102 = vpop.permute.xlu0 %1101
      %1103 = vrot.lane.b32.xlu0 %v1038, 20
      %v1104 = vpop.permute.xlu0 %1103
      %1105 = vrot.lane.b32.xlu0 %v1039, 20
      %v1106 = vpop.permute.xlu0 %1105
      %1107 = vrot.lane.b32.xlu0 %v1040, 20
      %v1108 = vpop.permute.xlu0 %1107
      %1109 = vrot.lane.b32.xlu0 %v1041, 20
      %v1110 = vpop.permute.xlu0 %1109
      %1111 = vrot.lane.b32.xlu0 %v1042, 20
      %v1112 = vpop.permute.xlu0 %1111
      %1113 = vrot.lane.b32.xlu0 %v1043, 20
      %v1114 = vpop.permute.xlu0 %1113
      %1115 = vrot.lane.b32.xlu0 %v1044, 20
      %v1116 = vpop.permute.xlu0 %1115
      %1117 = vrot.lane.b32.xlu0 %v1045, 20
      %v1118 = vpop.permute.xlu0 %1117
      %1119 = vrot.lane.b32.xlu0 %v1046, 20
      %v1120 = vpop.permute.xlu0 %1119
      %1121 = vrot.lane.b32.xlu0 %v1047, 20
      %v1122 = vpop.permute.xlu0 %1121
      %1123 = vrot.lane.b32.xlu0 %v1048, 20
      %v1124 = vpop.permute.xlu0 %1123
      %1125 = vrot.lane.b32.xlu0 %v1049, 20
      %v1126 = vpop.permute.xlu0 %1125
      %1127 = vrot.lane.b32.xlu0 %v1050, 20
      %v1128 = vpop.permute.xlu0 %1127
      %1129 = vrot.lane.b32.xlu0 %v1051, 20
      %v1130 = vpop.permute.xlu0 %1129
      %1131 = vrot.lane.b32.xlu0 %v1052, 20
      %v1132 = vpop.permute.xlu0 %1131
      %1133 = vrot.lane.b32.xlu0 %v1053, 20
      %v1134 = vpop.permute.xlu0 %1133
      %1135 = vrot.lane.b32.xlu0 %v1054, 20
      %v1136 = vpop.permute.xlu0 %1135
      %1137 = vrot.lane.b32.xlu0 %v1055, 20
      %v1138 = vpop.permute.xlu0 %1137
      %1139 = vrot.lane.b32.xlu0 %v1056, 20
      %v1140 = vpop.permute.xlu0 %1139
      %1141 = vrot.lane.b32.xlu0 %v1057, 20
      %v1142 = vpop.permute.xlu0 %1141
      %1143 = vrot.lane.b32.xlu0 %v1058, 20
      %v1144 = vpop.permute.xlu0 %1143
      %1145 = vrot.lane.b32.xlu0 %v1059, 20
      %v1146 = vpop.permute.xlu0 %1145
      %1147 = vrot.lane.b32.xlu0 %v1060, 20
      %v1148 = vpop.permute.xlu0 %1147
      %1149 = vrot.lane.b32.xlu0 %v1061, 20
      %v1150 = vpop.permute.xlu0 %1149
      %1151 = vrot.lane.b32.xlu0 %v1062, 20
      %v1152 = vpop.permute.xlu0 %1151
      %1153 = vrot.lane.b32.xlu0 %v1063, 20
      %v1154 = vpop.permute.xlu0 %1153
      %1155 = vrot.lane.b32.xlu0 %v1064, 20
      %v1156 = vpop.permute.xlu0 %1155
      %1157 = vrot.lane.b32.xlu0 %v1065, 20
      %v1158 = vpop.permute.xlu0 %1157
      %1159 = vrot.lane.b32.xlu0 %v1066, 20
      %v1160 = vpop.permute.xlu0 %1159
      %1161 = vrot.lane.b32.xlu0 %v1067, 20
      %v1162 = vpop.permute.xlu0 %1161
      %1163 = vrot.lane.b32.xlu0 %v1068, 20
      %v1164 = vpop.permute.xlu0 %1163
      %vm1197 = vcmask 195744
      %1198 = vst.msk [vmem:[#allocation2] sm:$0xff] %vm1197, %v1102
      %1199 = vst.msk [vmem:[#allocation2 + $0x8] sm:$0xff] %vm1197, %v1104
      %1200 = vst.msk [vmem:[#allocation2 + $0x10] sm:$0xff] %vm1197, %v1106
      %1201 = vst.msk [vmem:[#allocation2 + $0x18] sm:$0xff] %vm1197, %v1108
      %1202 = vst.msk [vmem:[#allocation2 + $0x20] sm:$0xff] %vm1197, %v1110
      %1203 = vst.msk [vmem:[#allocation2 + $0x28] sm:$0xff] %vm1197, %v1112
      %1204 = vst.msk [vmem:[#allocation2 + $0x30] sm:$0xff] %vm1197, %v1114
      %1205 = vst.msk [vmem:[#allocation2 + $0x38] sm:$0xff] %vm1197, %v1116
      %1206 = vst.msk [vmem:[#allocation2 + $0x40] sm:$0xff] %vm1197, %v1118
      %1207 = vst.msk [vmem:[#allocation2 + $0x48] sm:$0xff] %vm1197, %v1120
      %1208 = vst.msk [vmem:[#allocation2 + $0x50] sm:$0xff] %vm1197, %v1122
      %1209 = vst.msk [vmem:[#allocation2 + $0x58] sm:$0xff] %vm1197, %v1124
      %1210 = vst.msk [vmem:[#allocation2 + $0x60] sm:$0xff] %vm1197, %v1126
      %1211 = vst.msk [vmem:[#allocation2 + $0x68] sm:$0xff] %vm1197, %v1128
      %1212 = vst.msk [vmem:[#allocation2 + $0x70] sm:$0xff] %vm1197, %v1130
      %1213 = vst.msk [vmem:[#allocation2 + $0x78] sm:$0xff] %vm1197, %v1132
      %1214 = vst.msk [vmem:[#allocation2 + $0x80] sm:$0xff] %vm1197, %v1134
      %1215 = vst.msk [vmem:[#allocation2 + $0x88] sm:$0xff] %vm1197, %v1136
      %1216 = vst.msk [vmem:[#allocation2 + $0x90] sm:$0xff] %vm1197, %v1138
      %1217 = vst.msk [vmem:[#allocation2 + $0x98] sm:$0xff] %vm1197, %v1140
      %1218 = vst.msk [vmem:[#allocation2 + $0xa0] sm:$0xff] %vm1197, %v1142
      %1219 = vst.msk [vmem:[#allocation2 + $0xa8] sm:$0xff] %vm1197, %v1144
      %1220 = vst.msk [vmem:[#allocation2 + $0xb0] sm:$0xff] %vm1197, %v1146
      %1221 = vst.msk [vmem:[#allocation2 + $0xb8] sm:$0xff] %vm1197, %v1148
      %1222 = vst.msk [vmem:[#allocation2 + $0xc0] sm:$0xff] %vm1197, %v1150
      %1223 = vst.msk [vmem:[#allocation2 + $0xc8] sm:$0xff] %vm1197, %v1152
      %1224 = vst.msk [vmem:[#allocation2 + $0xd0] sm:$0xff] %vm1197, %v1154
      %1225 = vst.msk [vmem:[#allocation2 + $0xd8] sm:$0xff] %vm1197, %v1156
      %1226 = vst.msk [vmem:[#allocation2 + $0xe0] sm:$0xff] %vm1197, %v1158
      %1227 = vst.msk [vmem:[#allocation2 + $0xe8] sm:$0xff] %vm1197, %v1160
      %1228 = vst.msk [vmem:[#allocation2 + $0xf0] sm:$0xff] %vm1197, %v1162
      %1229 = vst.msk [vmem:[#allocation2 + $0xf8] sm:$0xff] %vm1197, %v1164
      %s1230 = sadd.s32 %s194, 2
      %s1231 = smul.u32 %s1230, 24
      %s1232 = scalar_lea.vmem %s183, %s1231
      %v1233 = vld [vmem:[%s1232] sm:$0xff]
      %v1234 = vld [vmem:[%s1232 + $0x8] sm:$0xff]
      %v1235 = vld [vmem:[%s1232 + $0x18] sm:$0xff]
      %v1236 = vld [vmem:[%s1232 + $0x20] sm:$0xff]
      %v1237 = vld [vmem:[%s1232 + $0x30] sm:$0xff]
      %v1238 = vld [vmem:[%s1232 + $0x38] sm:$0xff]
      %v1239 = vld [vmem:[%s1232 + $0x48] sm:$0xff]
      %v1240 = vld [vmem:[%s1232 + $0x50] sm:$0xff]
      %v1241 = vld [vmem:[%s1232 + $0x60] sm:$0xff]
      %v1242 = vld [vmem:[%s1232 + $0x68] sm:$0xff]
      %v1243 = vld [vmem:[%s1232 + $0x78] sm:$0xff]
      %v1244 = vld [vmem:[%s1232 + $0x80] sm:$0xff]
      %v1245 = vld [vmem:[%s1232 + $0x90] sm:$0xff]
      %v1246 = vld [vmem:[%s1232 + $0x98] sm:$0xff]
      %v1247 = vld [vmem:[%s1232 + $0xa8] sm:$0xff]
      %v1248 = vld [vmem:[%s1232 + $0xb0] sm:$0xff]
      %v1249 = vld [vmem:[%s1232 + $0xc0] sm:$0xff]
      %v1250 = vld [vmem:[%s1232 + $0xc8] sm:$0xff]
      %v1251 = vld [vmem:[%s1232 + $0xd8] sm:$0xff]
      %v1252 = vld [vmem:[%s1232 + $0xe0] sm:$0xff]
      %v1253 = vld [vmem:[%s1232 + $0xf0] sm:$0xff]
      %v1254 = vld [vmem:[%s1232 + $0xf8] sm:$0xff]
      %v1255 = vld [vmem:[%s1232 + $0x108] sm:$0xff]
      %v1256 = vld [vmem:[%s1232 + $0x110] sm:$0xff]
      %v1257 = vld [vmem:[%s1232 + $0x120] sm:$0xff]
      %v1258 = vld [vmem:[%s1232 + $0x128] sm:$0xff]
      %v1259 = vld [vmem:[%s1232 + $0x138] sm:$0xff]
      %v1260 = vld [vmem:[%s1232 + $0x140] sm:$0xff]
      %v1261 = vld [vmem:[%s1232 + $0x150] sm:$0xff]
      %v1262 = vld [vmem:[%s1232 + $0x158] sm:$0xff]
      %v1263 = vld [vmem:[%s1232 + $0x168] sm:$0xff]
      %v1264 = vld [vmem:[%s1232 + $0x170] sm:$0xff]
      %1297 = vrot.lane.b32.xlu0 %v1233, 24
      %v1298 = vpop.permute.xlu0 %1297
      %1299 = vrot.lane.b32.xlu0 %v1234, 24
      %v1300 = vpop.permute.xlu0 %1299
      %1301 = vrot.lane.b32.xlu0 %v1235, 24
      %v1302 = vpop.permute.xlu0 %1301
      %1303 = vrot.lane.b32.xlu0 %v1236, 24
      %v1304 = vpop.permute.xlu0 %1303
      %1305 = vrot.lane.b32.xlu0 %v1237, 24
      %v1306 = vpop.permute.xlu0 %1305
      %1307 = vrot.lane.b32.xlu0 %v1238, 24
      %v1308 = vpop.permute.xlu0 %1307
      %1309 = vrot.lane.b32.xlu0 %v1239, 24
      %v1310 = vpop.permute.xlu0 %1309
      %1311 = vrot.lane.b32.xlu0 %v1240, 24
      %v1312 = vpop.permute.xlu0 %1311
      %1313 = vrot.lane.b32.xlu0 %v1241, 24
      %v1314 = vpop.permute.xlu0 %1313
      %1315 = vrot.lane.b32.xlu0 %v1242, 24
      %v1316 = vpop.permute.xlu0 %1315
      %1317 = vrot.lane.b32.xlu0 %v1243, 24
      %v1318 = vpop.permute.xlu0 %1317
      %1319 = vrot.lane.b32.xlu0 %v1244, 24
      %v1320 = vpop.permute.xlu0 %1319
      %1321 = vrot.lane.b32.xlu0 %v1245, 24
      %v1322 = vpop.permute.xlu0 %1321
      %1323 = vrot.lane.b32.xlu0 %v1246, 24
      %v1324 = vpop.permute.xlu0 %1323
      %1325 = vrot.lane.b32.xlu0 %v1247, 24
      %v1326 = vpop.permute.xlu0 %1325
      %1327 = vrot.lane.b32.xlu0 %v1248, 24
      %v1328 = vpop.permute.xlu0 %1327
      %1329 = vrot.lane.b32.xlu0 %v1249, 24
      %v1330 = vpop.permute.xlu0 %1329
      %1331 = vrot.lane.b32.xlu0 %v1250, 24
      %v1332 = vpop.permute.xlu0 %1331
      %1333 = vrot.lane.b32.xlu0 %v1251, 24
      %v1334 = vpop.permute.xlu0 %1333
      %1335 = vrot.lane.b32.xlu0 %v1252, 24
      %v1336 = vpop.permute.xlu0 %1335
      %1337 = vrot.lane.b32.xlu0 %v1253, 24
      %v1338 = vpop.permute.xlu0 %1337
      %1339 = vrot.lane.b32.xlu0 %v1254, 24
      %v1340 = vpop.permute.xlu0 %1339
      %1341 = vrot.lane.b32.xlu0 %v1255, 24
      %v1342 = vpop.permute.xlu0 %1341
      %1343 = vrot.lane.b32.xlu0 %v1256, 24
      %v1344 = vpop.permute.xlu0 %1343
      %1345 = vrot.lane.b32.xlu0 %v1257, 24
      %v1346 = vpop.permute.xlu0 %1345
      %1347 = vrot.lane.b32.xlu0 %v1258, 24
      %v1348 = vpop.permute.xlu0 %1347
      %1349 = vrot.lane.b32.xlu0 %v1259, 24
      %v1350 = vpop.permute.xlu0 %1349
      %1351 = vrot.lane.b32.xlu0 %v1260, 24
      %v1352 = vpop.permute.xlu0 %1351
      %1353 = vrot.lane.b32.xlu0 %v1261, 24
      %v1354 = vpop.permute.xlu0 %1353
      %1355 = vrot.lane.b32.xlu0 %v1262, 24
      %v1356 = vpop.permute.xlu0 %1355
      %1357 = vrot.lane.b32.xlu0 %v1263, 24
      %v1358 = vpop.permute.xlu0 %1357
      %1359 = vrot.lane.b32.xlu0 %v1264, 24
      %v1360 = vpop.permute.xlu0 %1359
      %vm1393 = vcmask 228544
      %1394 = vst.msk [vmem:[#allocation2] sm:$0xff] %vm1393, %v1298
      %1395 = vst.msk [vmem:[#allocation2 + $0x8] sm:$0xff] %vm1393, %v1300
      %1396 = vst.msk [vmem:[#allocation2 + $0x10] sm:$0xff] %vm1393, %v1302
      %1397 = vst.msk [vmem:[#allocation2 + $0x18] sm:$0xff] %vm1393, %v1304
      %1398 = vst.msk [vmem:[#allocation2 + $0x20] sm:$0xff] %vm1393, %v1306
      %1399 = vst.msk [vmem:[#allocation2 + $0x28] sm:$0xff] %vm1393, %v1308
      %1400 = vst.msk [vmem:[#allocation2 + $0x30] sm:$0xff] %vm1393, %v1310
      %1401 = vst.msk [vmem:[#allocation2 + $0x38] sm:$0xff] %vm1393, %v1312
      %1402 = vst.msk [vmem:[#allocation2 + $0x40] sm:$0xff] %vm1393, %v1314
      %1403 = vst.msk [vmem:[#allocation2 + $0x48] sm:$0xff] %vm1393, %v1316
      %1404 = vst.msk [vmem:[#allocation2 + $0x50] sm:$0xff] %vm1393, %v1318
      %1405 = vst.msk [vmem:[#allocation2 + $0x58] sm:$0xff] %vm1393, %v1320
      %1406 = vst.msk [vmem:[#allocation2 + $0x60] sm:$0xff] %vm1393, %v1322
      %1407 = vst.msk [vmem:[#allocation2 + $0x68] sm:$0xff] %vm1393, %v1324
      %1408 = vst.msk [vmem:[#allocation2 + $0x70] sm:$0xff] %vm1393, %v1326
      %1409 = vst.msk [vmem:[#allocation2 + $0x78] sm:$0xff] %vm1393, %v1328
      %1410 = vst.msk [vmem:[#allocation2 + $0x80] sm:$0xff] %vm1393, %v1330
      %1411 = vst.msk [vmem:[#allocation2 + $0x88] sm:$0xff] %vm1393, %v1332
      %1412 = vst.msk [vmem:[#allocation2 + $0x90] sm:$0xff] %vm1393, %v1334
      %1413 = vst.msk [vmem:[#allocation2 + $0x98] sm:$0xff] %vm1393, %v1336
      %1414 = vst.msk [vmem:[#allocation2 + $0xa0] sm:$0xff] %vm1393, %v1338
      %1415 = vst.msk [vmem:[#allocation2 + $0xa8] sm:$0xff] %vm1393, %v1340
      %1416 = vst.msk [vmem:[#allocation2 + $0xb0] sm:$0xff] %vm1393, %v1342
      %1417 = vst.msk [vmem:[#allocation2 + $0xb8] sm:$0xff] %vm1393, %v1344
      %1418 = vst.msk [vmem:[#allocation2 + $0xc0] sm:$0xff] %vm1393, %v1346
      %1419 = vst.msk [vmem:[#allocation2 + $0xc8] sm:$0xff] %vm1393, %v1348
      %1420 = vst.msk [vmem:[#allocation2 + $0xd0] sm:$0xff] %vm1393, %v1350
      %1421 = vst.msk [vmem:[#allocation2 + $0xd8] sm:$0xff] %vm1393, %v1352
      %1422 = vst.msk [vmem:[#allocation2 + $0xe0] sm:$0xff] %vm1393, %v1354
      %1423 = vst.msk [vmem:[#allocation2 + $0xe8] sm:$0xff] %vm1393, %v1356
      %1424 = vst.msk [vmem:[#allocation2 + $0xf0] sm:$0xff] %vm1393, %v1358
      %1425 = vst.msk [vmem:[#allocation2 + $0xf8] sm:$0xff] %vm1393, %v1360
      %v1426 = vld [vmem:[%s1232 + $0x1] sm:$0xff]
      %v1427 = vld [vmem:[%s1232 + $0x9] sm:$0xff]
      %v1428 = vld [vmem:[%s1232 + $0x19] sm:$0xff]
      %v1429 = vld [vmem:[%s1232 + $0x21] sm:$0xff]
      %v1430 = vld [vmem:[%s1232 + $0x31] sm:$0xff]
      %v1431 = vld [vmem:[%s1232 + $0x39] sm:$0xff]
      %v1432 = vld [vmem:[%s1232 + $0x49] sm:$0xff]
      %v1433 = vld [vmem:[%s1232 + $0x51] sm:$0xff]
      %v1434 = vld [vmem:[%s1232 + $0x61] sm:$0xff]
      %v1435 = vld [vmem:[%s1232 + $0x69] sm:$0xff]
      %v1436 = vld [vmem:[%s1232 + $0x79] sm:$0xff]
      %v1437 = vld [vmem:[%s1232 + $0x81] sm:$0xff]
      %v1438 = vld [vmem:[%s1232 + $0x91] sm:$0xff]
      %v1439 = vld [vmem:[%s1232 + $0x99] sm:$0xff]
      %v1440 = vld [vmem:[%s1232 + $0xa9] sm:$0xff]
      %v1441 = vld [vmem:[%s1232 + $0xb1] sm:$0xff]
      %v1442 = vld [vmem:[%s1232 + $0xc1] sm:$0xff]
      %v1443 = vld [vmem:[%s1232 + $0xc9] sm:$0xff]
      %v1444 = vld [vmem:[%s1232 + $0xd9] sm:$0xff]
      %v1445 = vld [vmem:[%s1232 + $0xe1] sm:$0xff]
      %v1446 = vld [vmem:[%s1232 + $0xf1] sm:$0xff]
      %v1447 = vld [vmem:[%s1232 + $0xf9] sm:$0xff]
      %v1448 = vld [vmem:[%s1232 + $0x109] sm:$0xff]
      %v1449 = vld [vmem:[%s1232 + $0x111] sm:$0xff]
      %v1450 = vld [vmem:[%s1232 + $0x121] sm:$0xff]
      %v1451 = vld [vmem:[%s1232 + $0x129] sm:$0xff]
      %v1452 = vld [vmem:[%s1232 + $0x139] sm:$0xff]
      %v1453 = vld [vmem:[%s1232 + $0x141] sm:$0xff]
      %v1454 = vld [vmem:[%s1232 + $0x151] sm:$0xff]
      %v1455 = vld [vmem:[%s1232 + $0x159] sm:$0xff]
      %v1456 = vld [vmem:[%s1232 + $0x169] sm:$0xff]
      %v1457 = vld [vmem:[%s1232 + $0x171] sm:$0xff]
      %1490 = vrot.lane.b32.xlu0 %v1426, 28
      %v1491 = vpop.permute.xlu0 %1490
      %1492 = vrot.lane.b32.xlu0 %v1427, 28
      %v1493 = vpop.permute.xlu0 %1492
      %1494 = vrot.lane.b32.xlu0 %v1428, 28
      %v1495 = vpop.permute.xlu0 %1494
      %1496 = vrot.lane.b32.xlu0 %v1429, 28
      %v1497 = vpop.permute.xlu0 %1496
      %1498 = vrot.lane.b32.xlu0 %v1430, 28
      %v1499 = vpop.permute.xlu0 %1498
      %1500 = vrot.lane.b32.xlu0 %v1431, 28
      %v1501 = vpop.permute.xlu0 %1500
      %1502 = vrot.lane.b32.xlu0 %v1432, 28
      %v1503 = vpop.permute.xlu0 %1502
      %1504 = vrot.lane.b32.xlu0 %v1433, 28
      %v1505 = vpop.permute.xlu0 %1504
      %1506 = vrot.lane.b32.xlu0 %v1434, 28
      %v1507 = vpop.permute.xlu0 %1506
      %1508 = vrot.lane.b32.xlu0 %v1435, 28
      %v1509 = vpop.permute.xlu0 %1508
      %1510 = vrot.lane.b32.xlu0 %v1436, 28
      %v1511 = vpop.permute.xlu0 %1510
      %1512 = vrot.lane.b32.xlu0 %v1437, 28
      %v1513 = vpop.permute.xlu0 %1512
      %1514 = vrot.lane.b32.xlu0 %v1438, 28
      %v1515 = vpop.permute.xlu0 %1514
      %1516 = vrot.lane.b32.xlu0 %v1439, 28
      %v1517 = vpop.permute.xlu0 %1516
      %1518 = vrot.lane.b32.xlu0 %v1440, 28
      %v1519 = vpop.permute.xlu0 %1518
      %1520 = vrot.lane.b32.xlu0 %v1441, 28
      %v1521 = vpop.permute.xlu0 %1520
      %1522 = vrot.lane.b32.xlu0 %v1442, 28
      %v1523 = vpop.permute.xlu0 %1522
      %1524 = vrot.lane.b32.xlu0 %v1443, 28
      %v1525 = vpop.permute.xlu0 %1524
      %1526 = vrot.lane.b32.xlu0 %v1444, 28
      %v1527 = vpop.permute.xlu0 %1526
      %1528 = vrot.lane.b32.xlu0 %v1445, 28
      %v1529 = vpop.permute.xlu0 %1528
      %1530 = vrot.lane.b32.xlu0 %v1446, 28
      %v1531 = vpop.permute.xlu0 %1530
      %1532 = vrot.lane.b32.xlu0 %v1447, 28
      %v1533 = vpop.permute.xlu0 %1532
      %1534 = vrot.lane.b32.xlu0 %v1448, 28
      %v1535 = vpop.permute.xlu0 %1534
      %1536 = vrot.lane.b32.xlu0 %v1449, 28
      %v1537 = vpop.permute.xlu0 %1536
      %1538 = vrot.lane.b32.xlu0 %v1450, 28
      %v1539 = vpop.permute.xlu0 %1538
      %1540 = vrot.lane.b32.xlu0 %v1451, 28
      %v1541 = vpop.permute.xlu0 %1540
      %1542 = vrot.lane.b32.xlu0 %v1452, 28
      %v1543 = vpop.permute.xlu0 %1542
      %1544 = vrot.lane.b32.xlu0 %v1453, 28
      %v1545 = vpop.permute.xlu0 %1544
      %1546 = vrot.lane.b32.xlu0 %v1454, 28
      %v1547 = vpop.permute.xlu0 %1546
      %1548 = vrot.lane.b32.xlu0 %v1455, 28
      %v1549 = vpop.permute.xlu0 %1548
      %1550 = vrot.lane.b32.xlu0 %v1456, 28
      %v1551 = vpop.permute.xlu0 %1550
      %1552 = vrot.lane.b32.xlu0 %v1457, 28
      %v1553 = vpop.permute.xlu0 %1552
      %vm1586 = vcmask 261344
      %1587 = vst.msk [vmem:[#allocation2] sm:$0xff] %vm1586, %v1491
      %1588 = vst.msk [vmem:[#allocation2 + $0x8] sm:$0xff] %vm1586, %v1493
      %1589 = vst.msk [vmem:[#allocation2 + $0x10] sm:$0xff] %vm1586, %v1495
      %1590 = vst.msk [vmem:[#allocation2 + $0x18] sm:$0xff] %vm1586, %v1497
      %1591 = vst.msk [vmem:[#allocation2 + $0x20] sm:$0xff] %vm1586, %v1499
      %1592 = vst.msk [vmem:[#allocation2 + $0x28] sm:$0xff] %vm1586, %v1501
      %1593 = vst.msk [vmem:[#allocation2 + $0x30] sm:$0xff] %vm1586, %v1503
      %1594 = vst.msk [vmem:[#allocation2 + $0x38] sm:$0xff] %vm1586, %v1505
      %1595 = vst.msk [vmem:[#allocation2 + $0x40] sm:$0xff] %vm1586, %v1507
      %1596 = vst.msk [vmem:[#allocation2 + $0x48] sm:$0xff] %vm1586, %v1509
      %1597 = vst.msk [vmem:[#allocation2 + $0x50] sm:$0xff] %vm1586, %v1511
      %1598 = vst.msk [vmem:[#allocation2 + $0x58] sm:$0xff] %vm1586, %v1513
      %1599 = vst.msk [vmem:[#allocation2 + $0x60] sm:$0xff] %vm1586, %v1515
      %1600 = vst.msk [vmem:[#allocation2 + $0x68] sm:$0xff] %vm1586, %v1517
      %1601 = vst.msk [vmem:[#allocation2 + $0x70] sm:$0xff] %vm1586, %v1519
      %1602 = vst.msk [vmem:[#allocation2 + $0x78] sm:$0xff] %vm1586, %v1521
      %1603 = vst.msk [vmem:[#allocation2 + $0x80] sm:$0xff] %vm1586, %v1523
      %1604 = vst.msk [vmem:[#allocation2 + $0x88] sm:$0xff] %vm1586, %v1525
      %1605 = vst.msk [vmem:[#allocation2 + $0x90] sm:$0xff] %vm1586, %v1527
      %1606 = vst.msk [vmem:[#allocation2 + $0x98] sm:$0xff] %vm1586, %v1529
      %1607 = vst.msk [vmem:[#allocation2 + $0xa0] sm:$0xff] %vm1586, %v1531
      %1608 = vst.msk [vmem:[#allocation2 + $0xa8] sm:$0xff] %vm1586, %v1533
      %1609 = vst.msk [vmem:[#allocation2 + $0xb0] sm:$0xff] %vm1586, %v1535
      %1610 = vst.msk [vmem:[#allocation2 + $0xb8] sm:$0xff] %vm1586, %v1537
      %1611 = vst.msk [vmem:[#allocation2 + $0xc0] sm:$0xff] %vm1586, %v1539
      %1612 = vst.msk [vmem:[#allocation2 + $0xc8] sm:$0xff] %vm1586, %v1541
      %1613 = vst.msk [vmem:[#allocation2 + $0xd0] sm:$0xff] %vm1586, %v1543
      %1614 = vst.msk [vmem:[#allocation2 + $0xd8] sm:$0xff] %vm1586, %v1545
      %1615 = vst.msk [vmem:[#allocation2 + $0xe0] sm:$0xff] %vm1586, %v1547
      %1616 = vst.msk [vmem:[#allocation2 + $0xe8] sm:$0xff] %vm1586, %v1549
      %1617 = vst.msk [vmem:[#allocation2 + $0xf0] sm:$0xff] %vm1586, %v1551
      %1618 = vst.msk [vmem:[#allocation2 + $0xf8] sm:$0xff] %vm1586, %v1553
      %v1619 = vld [vmem:[%s1232 + $0x2] sm:$0xff]
      %v1620 = vld [vmem:[%s1232 + $0xa] sm:$0xff]
      %v1621 = vld [vmem:[%s1232 + $0x1a] sm:$0xff]
      %v1622 = vld [vmem:[%s1232 + $0x22] sm:$0xff]
      %v1623 = vld [vmem:[%s1232 + $0x32] sm:$0xff]
      %v1624 = vld [vmem:[%s1232 + $0x3a] sm:$0xff]
      %v1625 = vld [vmem:[%s1232 + $0x4a] sm:$0xff]
      %v1626 = vld [vmem:[%s1232 + $0x52] sm:$0xff]
      %v1627 = vld [vmem:[%s1232 + $0x62] sm:$0xff]
      %v1628 = vld [vmem:[%s1232 + $0x6a] sm:$0xff]
      %v1629 = vld [vmem:[%s1232 + $0x7a] sm:$0xff]
      %v1630 = vld [vmem:[%s1232 + $0x82] sm:$0xff]
      %v1631 = vld [vmem:[%s1232 + $0x92] sm:$0xff]
      %v1632 = vld [vmem:[%s1232 + $0x9a] sm:$0xff]
      %v1633 = vld [vmem:[%s1232 + $0xaa] sm:$0xff]
      %v1634 = vld [vmem:[%s1232 + $0xb2] sm:$0xff]
      %v1635 = vld [vmem:[%s1232 + $0xc2] sm:$0xff]
      %v1636 = vld [vmem:[%s1232 + $0xca] sm:$0xff]
      %v1637 = vld [vmem:[%s1232 + $0xda] sm:$0xff]
      %v1638 = vld [vmem:[%s1232 + $0xe2] sm:$0xff]
      %v1639 = vld [vmem:[%s1232 + $0xf2] sm:$0xff]
      %v1640 = vld [vmem:[%s1232 + $0xfa] sm:$0xff]
      %v1641 = vld [vmem:[%s1232 + $0x10a] sm:$0xff]
      %v1642 = vld [vmem:[%s1232 + $0x112] sm:$0xff]
      %v1643 = vld [vmem:[%s1232 + $0x122] sm:$0xff]
      %v1644 = vld [vmem:[%s1232 + $0x12a] sm:$0xff]
      %v1645 = vld [vmem:[%s1232 + $0x13a] sm:$0xff]
      %v1646 = vld [vmem:[%s1232 + $0x142] sm:$0xff]
      %v1647 = vld [vmem:[%s1232 + $0x152] sm:$0xff]
      %v1648 = vld [vmem:[%s1232 + $0x15a] sm:$0xff]
      %v1649 = vld [vmem:[%s1232 + $0x16a] sm:$0xff]
      %v1650 = vld [vmem:[%s1232 + $0x172] sm:$0xff]
      %1683 = vrot.lane.b32.xlu0 %v1619, 32
      %v1684 = vpop.permute.xlu0 %1683
      %1685 = vrot.lane.b32.xlu0 %v1620, 32
      %v1686 = vpop.permute.xlu0 %1685
      %1687 = vrot.lane.b32.xlu0 %v1621, 32
      %v1688 = vpop.permute.xlu0 %1687
      %1689 = vrot.lane.b32.xlu0 %v1622, 32
      %v1690 = vpop.permute.xlu0 %1689
      %1691 = vrot.lane.b32.xlu0 %v1623, 32
      %v1692 = vpop.permute.xlu0 %1691
      %1693 = vrot.lane.b32.xlu0 %v1624, 32
      %v1694 = vpop.permute.xlu0 %1693
      %1695 = vrot.lane.b32.xlu0 %v1625, 32
      %v1696 = vpop.permute.xlu0 %1695
      %1697 = vrot.lane.b32.xlu0 %v1626, 32
      %v1698 = vpop.permute.xlu0 %1697
      %1699 = vrot.lane.b32.xlu0 %v1627, 32
      %v1700 = vpop.permute.xlu0 %1699
      %1701 = vrot.lane.b32.xlu0 %v1628, 32
      %v1702 = vpop.permute.xlu0 %1701
      %1703 = vrot.lane.b32.xlu0 %v1629, 32
      %v1704 = vpop.permute.xlu0 %1703
      %1705 = vrot.lane.b32.xlu0 %v1630, 32
      %v1706 = vpop.permute.xlu0 %1705
      %1707 = vrot.lane.b32.xlu0 %v1631, 32
      %v1708 = vpop.permute.xlu0 %1707
      %1709 = vrot.lane.b32.xlu0 %v1632, 32
      %v1710 = vpop.permute.xlu0 %1709
      %1711 = vrot.lane.b32.xlu0 %v1633, 32
      %v1712 = vpop.permute.xlu0 %1711
      %1713 = vrot.lane.b32.xlu0 %v1634, 32
      %v1714 = vpop.permute.xlu0 %1713
      %1715 = vrot.lane.b32.xlu0 %v1635, 32
      %v1716 = vpop.permute.xlu0 %1715
      %1717 = vrot.lane.b32.xlu0 %v1636, 32
      %v1718 = vpop.permute.xlu0 %1717
      %1719 = vrot.lane.b32.xlu0 %v1637, 32
      %v1720 = vpop.permute.xlu0 %1719
      %1721 = vrot.lane.b32.xlu0 %v1638, 32
      %v1722 = vpop.permute.xlu0 %1721
      %1723 = vrot.lane.b32.xlu0 %v1639, 32
      %v1724 = vpop.permute.xlu0 %1723
      %1725 = vrot.lane.b32.xlu0 %v1640, 32
      %v1726 = vpop.permute.xlu0 %1725
      %1727 = vrot.lane.b32.xlu0 %v1641, 32
      %v1728 = vpop.permute.xlu0 %1727
      %1729 = vrot.lane.b32.xlu0 %v1642, 32
      %v1730 = vpop.permute.xlu0 %1729
      %1731 = vrot.lane.b32.xlu0 %v1643, 32
      %v1732 = vpop.permute.xlu0 %1731
      %1733 = vrot.lane.b32.xlu0 %v1644, 32
      %v1734 = vpop.permute.xlu0 %1733
      %1735 = vrot.lane.b32.xlu0 %v1645, 32
      %v1736 = vpop.permute.xlu0 %1735
      %1737 = vrot.lane.b32.xlu0 %v1646, 32
      %v1738 = vpop.permute.xlu0 %1737
      %1739 = vrot.lane.b32.xlu0 %v1647, 32
      %v1740 = vpop.permute.xlu0 %1739
      %1741 = vrot.lane.b32.xlu0 %v1648, 32
      %v1742 = vpop.permute.xlu0 %1741
      %1743 = vrot.lane.b32.xlu0 %v1649, 32
      %v1744 = vpop.permute.xlu0 %1743
      %1745 = vrot.lane.b32.xlu0 %v1650, 32
      %v1746 = vpop.permute.xlu0 %1745
      %vm1779 = vcmask 294144
      %1780 = vst.msk [vmem:[#allocation2] sm:$0xff] %vm1779, %v1684
      %1781 = vst.msk [vmem:[#allocation2 + $0x8] sm:$0xff] %vm1779, %v1686
      %1782 = vst.msk [vmem:[#allocation2 + $0x10] sm:$0xff] %vm1779, %v1688
      %1783 = vst.msk [vmem:[#allocation2 + $0x18] sm:$0xff] %vm1779, %v1690
      %1784 = vst.msk [vmem:[#allocation2 + $0x20] sm:$0xff] %vm1779, %v1692
      %1785 = vst.msk [vmem:[#allocation2 + $0x28] sm:$0xff] %vm1779, %v1694
      %1786 = vst.msk [vmem:[#allocation2 + $0x30] sm:$0xff] %vm1779, %v1696
      %1787 = vst.msk [vmem:[#allocation2 + $0x38] sm:$0xff] %vm1779, %v1698
      %1788 = vst.msk [vmem:[#allocation2 + $0x40] sm:$0xff] %vm1779, %v1700
      %1789 = vst.msk [vmem:[#allocation2 + $0x48] sm:$0xff] %vm1779, %v1702
      %1790 = vst.msk [vmem:[#allocation2 + $0x50] sm:$0xff] %vm1779, %v1704
      %1791 = vst.msk [vmem:[#allocation2 + $0x58] sm:$0xff] %vm1779, %v1706
      %1792 = vst.msk [vmem:[#allocation2 + $0x60] sm:$0xff] %vm1779, %v1708
      %1793 = vst.msk [vmem:[#allocation2 + $0x68] sm:$0xff] %vm1779, %v1710
      %1794 = vst.msk [vmem:[#allocation2 + $0x70] sm:$0xff] %vm1779, %v1712
      %1795 = vst.msk [vmem:[#allocation2 + $0x78] sm:$0xff] %vm1779, %v1714
      %1796 = vst.msk [vmem:[#allocation2 + $0x80] sm:$0xff] %vm1779, %v1716
      %1797 = vst.msk [vmem:[#allocation2 + $0x88] sm:$0xff] %vm1779, %v1718
      %1798 = vst.msk [vmem:[#allocation2 + $0x90] sm:$0xff] %vm1779, %v1720
      %1799 = vst.msk [vmem:[#allocation2 + $0x98] sm:$0xff] %vm1779, %v1722
      %1800 = vst.msk [vmem:[#allocation2 + $0xa0] sm:$0xff] %vm1779, %v1724
      %1801 = vst.msk [vmem:[#allocation2 + $0xa8] sm:$0xff] %vm1779, %v1726
      %1802 = vst.msk [vmem:[#allocation2 + $0xb0] sm:$0xff] %vm1779, %v1728
      %1803 = vst.msk [vmem:[#allocation2 + $0xb8] sm:$0xff] %vm1779, %v1730
      %1804 = vst.msk [vmem:[#allocation2 + $0xc0] sm:$0xff] %vm1779, %v1732
      %1805 = vst.msk [vmem:[#allocation2 + $0xc8] sm:$0xff] %vm1779, %v1734
      %1806 = vst.msk [vmem:[#allocation2 + $0xd0] sm:$0xff] %vm1779, %v1736
      %1807 = vst.msk [vmem:[#allocation2 + $0xd8] sm:$0xff] %vm1779, %v1738
      %1808 = vst.msk [vmem:[#allocation2 + $0xe0] sm:$0xff] %vm1779, %v1740
      %1809 = vst.msk [vmem:[#allocation2 + $0xe8] sm:$0xff] %vm1779, %v1742
      %1810 = vst.msk [vmem:[#allocation2 + $0xf0] sm:$0xff] %vm1779, %v1744
      %1811 = vst.msk [vmem:[#allocation2 + $0xf8] sm:$0xff] %vm1779, %v1746
      %v1812 = vld [vmem:[#allocation2] sm:$0xff]
      %v1813 = vld [vmem:[#allocation2 + $0x8] sm:$0xff]
      %v1814 = vld [vmem:[#allocation2 + $0x10] sm:$0xff]
      %v1815 = vld [vmem:[#allocation2 + $0x18] sm:$0xff]
      %v1816 = vld [vmem:[#allocation2 + $0x20] sm:$0xff]
      %v1817 = vld [vmem:[#allocation2 + $0x28] sm:$0xff]
      %v1818 = vld [vmem:[#allocation2 + $0x30] sm:$0xff]
      %v1819 = vld [vmem:[#allocation2 + $0x38] sm:$0xff]
      %v1820 = vld [vmem:[#allocation2 + $0x40] sm:$0xff]
      %v1821 = vld [vmem:[#allocation2 + $0x48] sm:$0xff]
      %v1822 = vld [vmem:[#allocation2 + $0x50] sm:$0xff]
      %v1823 = vld [vmem:[#allocation2 + $0x58] sm:$0xff]
      %v1824 = vld [vmem:[#allocation2 + $0x60] sm:$0xff]
      %v1825 = vld [vmem:[#allocation2 + $0x68] sm:$0xff]
      %v1826 = vld [vmem:[#allocation2 + $0x70] sm:$0xff]
      %v1827 = vld [vmem:[#allocation2 + $0x78] sm:$0xff]
      %v1828 = vld [vmem:[#allocation2 + $0x80] sm:$0xff]
      %v1829 = vld [vmem:[#allocation2 + $0x88] sm:$0xff]
      %v1830 = vld [vmem:[#allocation2 + $0x90] sm:$0xff]
      %v1831 = vld [vmem:[#allocation2 + $0x98] sm:$0xff]
      %v1832 = vld [vmem:[#allocation2 + $0xa0] sm:$0xff]
      %v1833 = vld [vmem:[#allocation2 + $0xa8] sm:$0xff]
      %v1834 = vld [vmem:[#allocation2 + $0xb0] sm:$0xff]
      %v1835 = vld [vmem:[#allocation2 + $0xb8] sm:$0xff]
      %v1836 = vld [vmem:[#allocation2 + $0xc0] sm:$0xff]
      %v1837 = vld [vmem:[#allocation2 + $0xc8] sm:$0xff]
      %v1838 = vld [vmem:[#allocation2 + $0xd0] sm:$0xff]
      %v1839 = vld [vmem:[#allocation2 + $0xd8] sm:$0xff]
      %v1840 = vld [vmem:[#allocation2 + $0xe0] sm:$0xff]
      %v1841 = vld [vmem:[#allocation2 + $0xe8] sm:$0xff]
      %v1842 = vld [vmem:[#allocation2 + $0xf0] sm:$0xff]
      %v1843 = vld [vmem:[#allocation2 + $0xf8] sm:$0xff]
      %v1844 = vld [vmem:[%s1] sm:$0xff]
      %v1845 = vld [vmem:[%s1 + $0x8] sm:$0xff]
      %v1846 = vld [vmem:[%s1 + $0x10] sm:$0xff]
      %v1847 = vld [vmem:[%s1 + $0x18] sm:$0xff]
      %v1848 = vld [vmem:[%s1 + $0x20] sm:$0xf]
      %vm1849 = vcmask 293888
      %v1851 = vsel %vm1849, %v1812, 0
      %v1854 = vsel %vm1849, %v1813, 0
      %v1857 = vsel %vm1849, %v1814, 0
      %v1860 = vsel %vm1849, %v1815, 0
      %v1863 = vsel %vm1849, %v1816, 0
      %v1866 = vsel %vm1849, %v1817, 0
      %v1869 = vsel %vm1849, %v1818, 0
      %v1872 = vsel %vm1849, %v1819, 0
      %v1875 = vsel %vm1849, %v1820, 0
      %v1878 = vsel %vm1849, %v1821, 0
      %v1881 = vsel %vm1849, %v1822, 0
      %v1884 = vsel %vm1849, %v1823, 0
      %v1887 = vsel %vm1849, %v1824, 0
      %v1890 = vsel %vm1849, %v1825, 0
      %v1893 = vsel %vm1849, %v1826, 0
      %v1896 = vsel %vm1849, %v1827, 0
      %v1899 = vsel %vm1849, %v1828, 0
      %v1902 = vsel %vm1849, %v1829, 0
      %v1905 = vsel %vm1849, %v1830, 0
      %v1908 = vsel %vm1849, %v1831, 0
      %v1911 = vsel %vm1849, %v1832, 0
      %v1914 = vsel %vm1849, %v1833, 0
      %v1917 = vsel %vm1849, %v1834, 0
      %v1920 = vsel %vm1849, %v1835, 0
      %v1923 = vsel %vm1849, %v1836, 0
      %v1926 = vsel %vm1849, %v1837, 0
      %v1929 = vsel %vm1849, %v1838, 0
      %v1932 = vsel %vm1849, %v1839, 0
      %v1935 = vsel %vm1849, %v1840, 0
      %v1938 = vsel %vm1849, %v1841, 0
      %v1941 = vsel %vm1849, %v1842, 0
      %v1944 = vsel %vm1849, %v1843, 0
      %vm1946 = vcmask 1043456
      %v1948 = vsel %vm1946, %v1848, 0
      %1950 = vmatprep.subr.mxu0 0.0
      %1951 = vmatpush1.msra.mxu0 %v1844
      %1952 = vmatprep.subr.mxu0 0.0
      %1953 = vmatpush1.msra.mxu0 %v1845
      %1954 = vmatprep.subr.mxu0 0.0
      %1955 = vmatpush1.msra.mxu0 %v1846
      %1956 = vmatprep.subr.mxu0 0.0
      %1957 = vmatpush1.msra.mxu0 %v1847
      %1958 = vmatprep.subr.mxu0 0.0
      %1959 = vmatpush1.msra.mxu0 %v1948
      %1960 = vmatprep.subr.mxu0 0.0
      %1961 = vmatpush1.msra.mxu0 0.0
      %1962 = vmatprep.subr.mxu0 0.0
      %1963 = vmatpush1.msra.mxu0 0.0
      %1964 = vmatprep.subr.mxu0 0.0
      %1965 = vmatpush1.msra.mxu0 0.0
      %1966 = vmatprep.subr.mxu0 0.0
      %1967 = vmatpush1.msra.mxu0 0.0
      %1968 = vmatprep.subr.mxu0 0.0
      %1969 = vmatpush1.msra.mxu0 0.0
      %1970 = vmatprep.subr.mxu0 0.0
      %1971 = vmatpush1.msra.mxu0 0.0
      %1972 = vmatprep.subr.mxu0 0.0
      %1973 = vmatpush1.msra.mxu0 0.0
      %1974 = vmatprep.subr.mxu0 0.0
      %1975 = vmatpush1.msra.mxu0 0.0
      %1976 = vmatprep.subr.mxu0 0.0
      %1977 = vmatpush1.msra.mxu0 0.0
      %1978 = vmatprep.subr.mxu0 0.0
      %1979 = vmatpush1.msra.mxu0 0.0
      %1980 = vmatprep.subr.mxu0 0.0
      %1981 = vmatpush1.msra.mxu0 0.0
      %1982 = vmatprep.subr.mxu0 0.0
      %1983 = vmatpush1.msra.mxu0 0.0
      %1984 = vmatprep.subr.mxu0 0.0
      %1985 = vmatpush1.msra.mxu0 0.0
      %1986 = vmatprep.subr.mxu0 0.0
      %1987 = vmatpush1.msra.mxu0 0.0
      %1988 = vmatprep.subr.mxu0 0.0
      %1989 = vmatpush1.msra.mxu0 0.0
      %1990 = vmatprep.subr.mxu0 0.0
      %1991 = vmatpush1.msra.mxu0 0.0
      %1992 = vmatprep.subr.mxu0 0.0
      %1993 = vmatpush1.msra.mxu0 0.0
      %1994 = vmatprep.subr.mxu0 0.0
      %1995 = vmatpush1.msra.mxu0 0.0
      %1996 = vmatprep.subr.mxu0 0.0
      %1997 = vmatpush1.msra.mxu0 0.0
      %1998 = vmatprep.subr.mxu0 0.0
      %1999 = vmatpush1.msra.mxu0 0.0
      %2000 = vmatprep.subr.mxu0 0.0
      %2001 = vmatpush1.msra.mxu0 0.0
      %2002 = vmatprep.subr.mxu0 0.0
      %2003 = vmatpush1.msra.mxu0 0.0
      %2004 = vmatprep.subr.mxu0 0.0
      %2005 = vmatpush1.msra.mxu0 0.0
      %2006 = vmatprep.subr.mxu0 0.0
      %2007 = vmatpush1.msra.mxu0 0.0
      %2008 = vmatprep.subr.mxu0 0.0
      %2009 = vmatpush1.msra.mxu0 0.0
      %2010 = vmatprep.subr.mxu0 0.0
      %2011 = vmatpush1.msra.mxu0 0.0
      %2012 = vmatprep.subr.mxu0 0.0
      %2013 = vmatpush1.msra.mxu0 0.0
      %2014 = vmatprep.mubr.f32.mxu0 0.0
      %2015 = vmatmul.mubr.f32.gmra.mrb[0].mxu0 %v1851
      %v2016 = vpop.f32.mrb[0].mxu0
      %v2017 = vadd.f32 0.0, %v2016
      %v2018 = vpop.f32.mrb[0].mxu0
      %2019 = vmatprep.mubr.f32.mxu0 0.0
      %2020 = vmatmul.mubr.f32.gmra.mrb[0].mxu0 %v1854
      %v2021 = vpop.f32.mrb[0].mxu0
      %v2022 = vadd.f32 0.0, %v2021
      %v2023 = vpop.f32.mrb[0].mxu0
      %2024 = vmatprep.mubr.f32.mxu0 0.0
      %2025 = vmatmul.mubr.f32.gmra.mrb[0].mxu0 %v1857
      %v2026 = vpop.f32.mrb[0].mxu0
      %v2027 = vadd.f32 0.0, %v2026
      %v2028 = vpop.f32.mrb[0].mxu0
      %2029 = vmatprep.mubr.f32.mxu0 0.0
      %2030 = vmatmul.mubr.f32.gmra.mrb[0].mxu0 %v1860
      %v2031 = vpop.f32.mrb[0].mxu0
      %v2032 = vadd.f32 0.0, %v2031
      %v2033 = vpop.f32.mrb[0].mxu0
      %2034 = vmatprep.mubr.f32.mxu0 0.0
      %2035 = vmatmul.mubr.f32.gmra.mrb[0].mxu0 %v1863
      %v2036 = vpop.f32.mrb[0].mxu0
      %v2037 = vadd.f32 0.0, %v2036
      %v2038 = vpop.f32.mrb[0].mxu0
      %2039 = vmatprep.mubr.f32.mxu0 0.0
      %2040 = vmatmul.mubr.f32.gmra.mrb[0].mxu0 %v1866
      %v2041 = vpop.f32.mrb[0].mxu0
      %v2042 = vadd.f32 0.0, %v2041
      %v2043 = vpop.f32.mrb[0].mxu0
      %2044 = vmatprep.mubr.f32.mxu0 0.0
      %2045 = vmatmul.mubr.f32.gmra.mrb[0].mxu0 %v1869
      %v2046 = vpop.f32.mrb[0].mxu0
      %v2047 = vadd.f32 0.0, %v2046
      %v2048 = vpop.f32.mrb[0].mxu0
      %2049 = vmatprep.mubr.f32.mxu0 0.0
      %2050 = vmatmul.mubr.f32.gmra.mrb[0].mxu0 %v1872
      %v2051 = vpop.f32.mrb[0].mxu0
      %v2052 = vadd.f32 0.0, %v2051
      %v2053 = vpop.f32.mrb[0].mxu0
      %2054 = vmatprep.mubr.f32.mxu0 0.0
      %2055 = vmatmul.mubr.f32.gmra.mrb[0].mxu0 %v1875
      %v2056 = vpop.f32.mrb[0].mxu0
      %v2057 = vadd.f32 0.0, %v2056
      %v2058 = vpop.f32.mrb[0].mxu0
      %2059 = vmatprep.mubr.f32.mxu0 0.0
      %2060 = vmatmul.mubr.f32.gmra.mrb[0].mxu0 %v1878
      %v2061 = vpop.f32.mrb[0].mxu0
      %v2062 = vadd.f32 0.0, %v2061
      %v2063 = vpop.f32.mrb[0].mxu0
      %2064 = vmatprep.mubr.f32.mxu0 0.0
      %2065 = vmatmul.mubr.f32.gmra.mrb[0].mxu0 %v1881
      %v2066 = vpop.f32.mrb[0].mxu0
      %v2067 = vadd.f32 0.0, %v2066
      %v2068 = vpop.f32.mrb[0].mxu0
      %2069 = vmatprep.mubr.f32.mxu0 0.0
      %2070 = vmatmul.mubr.f32.gmra.mrb[0].mxu0 %v1884
      %v2071 = vpop.f32.mrb[0].mxu0
      %v2072 = vadd.f32 0.0, %v2071
      %v2073 = vpop.f32.mrb[0].mxu0
      %2074 = vmatprep.mubr.f32.mxu0 0.0
      %2075 = vmatmul.mubr.f32.gmra.mrb[0].mxu0 %v1887
      %v2076 = vpop.f32.mrb[0].mxu0
      %v2077 = vadd.f32 0.0, %v2076
      %v2078 = vpop.f32.mrb[0].mxu0
      %2079 = vmatprep.mubr.f32.mxu0 0.0
      %2080 = vmatmul.mubr.f32.gmra.mrb[0].mxu0 %v1890
      %v2081 = vpop.f32.mrb[0].mxu0
      %v2082 = vadd.f32 0.0, %v2081
      %v2083 = vpop.f32.mrb[0].mxu0
      %2084 = vmatprep.mubr.f32.mxu0 0.0
      %2085 = vmatmul.mubr.f32.gmra.mrb[0].mxu0 %v1893
      %v2086 = vpop.f32.mrb[0].mxu0
      %v2087 = vadd.f32 0.0, %v2086
      %v2088 = vpop.f32.mrb[0].mxu0
      %2089 = vmatprep.mubr.f32.mxu0 0.0
      %2090 = vmatmul.mubr.f32.gmra.mrb[0].mxu0 %v1896
      %v2091 = vpop.f32.mrb[0].mxu0
      %v2092 = vadd.f32 0.0, %v2091
      %v2093 = vpop.f32.mrb[0].mxu0
      %2094 = vmatprep.mubr.f32.mxu0 0.0
      %2095 = vmatmul.mubr.f32.gmra.mrb[0].mxu0 %v1899
      %v2096 = vpop.f32.mrb[0].mxu0
      %v2097 = vadd.f32 0.0, %v2096
      %v2098 = vpop.f32.mrb[0].mxu0
      %2099 = vmatprep.mubr.f32.mxu0 0.0
      %2100 = vmatmul.mubr.f32.gmra.mrb[0].mxu0 %v1902
      %v2101 = vpop.f32.mrb[0].mxu0
      %v2102 = vadd.f32 0.0, %v2101
      %v2103 = vpop.f32.mrb[0].mxu0
      %2104 = vmatprep.mubr.f32.mxu0 0.0
      %2105 = vmatmul.mubr.f32.gmra.mrb[0].mxu0 %v1905
      %v2106 = vpop.f32.mrb[0].mxu0
      %v2107 = vadd.f32 0.0, %v2106
      %v2108 = vpop.f32.mrb[0].mxu0
      %2109 = vmatprep.mubr.f32.mxu0 0.0
      %2110 = vmatmul.mubr.f32.gmra.mrb[0].mxu0 %v1908
      %v2111 = vpop.f32.mrb[0].mxu0
      %v2112 = vadd.f32 0.0, %v2111
      %v2113 = vpop.f32.mrb[0].mxu0
      %2114 = vmatprep.mubr.f32.mxu0 0.0
      %2115 = vmatmul.mubr.f32.gmra.mrb[0].mxu0 %v1911
      %v2116 = vpop.f32.mrb[0].mxu0
      %v2117 = vadd.f32 0.0, %v2116
      %v2118 = vpop.f32.mrb[0].mxu0
      %2119 = vmatprep.mubr.f32.mxu0 0.0
      %2120 = vmatmul.mubr.f32.gmra.mrb[0].mxu0 %v1914
      %v2121 = vpop.f32.mrb[0].mxu0
      %v2122 = vadd.f32 0.0, %v2121
      %v2123 = vpop.f32.mrb[0].mxu0
      %2124 = vmatprep.mubr.f32.mxu0 0.0
      %2125 = vmatmul.mubr.f32.gmra.mrb[0].mxu0 %v1917
      %v2126 = vpop.f32.mrb[0].mxu0
      %v2127 = vadd.f32 0.0, %v2126
      %v2128 = vpop.f32.mrb[0].mxu0
      %2129 = vmatprep.mubr.f32.mxu0 0.0
      %2130 = vmatmul.mubr.f32.gmra.mrb[0].mxu0 %v1920
      %v2131 = vpop.f32.mrb[0].mxu0
      %v2132 = vadd.f32 0.0, %v2131
      %v2133 = vpop.f32.mrb[0].mxu0
      %2134 = vmatprep.mubr.f32.mxu0 0.0
      %2135 = vmatmul.mubr.f32.gmra.mrb[0].mxu0 %v1923
      %v2136 = vpop.f32.mrb[0].mxu0
      %v2137 = vadd.f32 0.0, %v2136
      %v2138 = vpop.f32.mrb[0].mxu0
      %2139 = vmatprep.mubr.f32.mxu0 0.0
      %2140 = vmatmul.mubr.f32.gmra.mrb[0].mxu0 %v1926
      %v2141 = vpop.f32.mrb[0].mxu0
      %v2142 = vadd.f32 0.0, %v2141
      %v2143 = vpop.f32.mrb[0].mxu0
      %2144 = vmatprep.mubr.f32.mxu0 0.0
      %2145 = vmatmul.mubr.f32.gmra.mrb[0].mxu0 %v1929
      %v2146 = vpop.f32.mrb[0].mxu0
      %v2147 = vadd.f32 0.0, %v2146
      %v2148 = vpop.f32.mrb[0].mxu0
      %2149 = vmatprep.mubr.f32.mxu0 0.0
      %2150 = vmatmul.mubr.f32.gmra.mrb[0].mxu0 %v1932
      %v2151 = vpop.f32.mrb[0].mxu0
      %v2152 = vadd.f32 0.0, %v2151
      %v2153 = vpop.f32.mrb[0].mxu0
      %2154 = vmatprep.mubr.f32.mxu0 0.0
      %2155 = vmatmul.mubr.f32.gmra.mrb[0].mxu0 %v1935
      %v2156 = vpop.f32.mrb[0].mxu0
      %v2157 = vadd.f32 0.0, %v2156
      %v2158 = vpop.f32.mrb[0].mxu0
      %2159 = vmatprep.mubr.f32.mxu0 0.0
      %2160 = vmatmul.mubr.f32.gmra.mrb[0].mxu0 %v1938
      %v2161 = vpop.f32.mrb[0].mxu0
      %v2162 = vadd.f32 0.0, %v2161
      %v2163 = vpop.f32.mrb[0].mxu0
      %2164 = vmatprep.mubr.f32.mxu0 0.0
      %2165 = vmatmul.mubr.f32.gmra.mrb[0].mxu0 %v1941
      %v2166 = vpop.f32.mrb[0].mxu0
      %v2167 = vadd.f32 0.0, %v2166
      %v2168 = vpop.f32.mrb[0].mxu0
      %2169 = vmatprep.mubr.f32.mxu0 0.0
      %2170 = vmatmul.mubr.f32.gmra.mrb[0].mxu0 %v1944
      %v2171 = vpop.f32.mrb[0].mxu0
      %v2172 = vadd.f32 0.0, %v2171
      %v2173 = vpop.f32.mrb[0].mxu0
      %2174 = vdwg.mxu0
      %v2175 = vld [vmem:[%s2] sm:$0xf]
      %v2177 = vsel %vm229, %v2017, 0
      %v2180 = vsel %vm229, %v2022, 0
      %v2183 = vsel %vm229, %v2027, 0
      %v2186 = vsel %vm229, %v2032, 0
      %v2189 = vsel %vm229, %v2037, 0
      %v2192 = vsel %vm229, %v2042, 0
      %v2195 = vsel %vm229, %v2047, 0
      %v2198 = vsel %vm229, %v2052, 0
      %v2201 = vsel %vm229, %v2057, 0
      %v2204 = vsel %vm229, %v2062, 0
      %v2207 = vsel %vm229, %v2067, 0
      %v2210 = vsel %vm229, %v2072, 0
      %v2213 = vsel %vm229, %v2077, 0
      %v2216 = vsel %vm229, %v2082, 0
      %v2219 = vsel %vm229, %v2087, 0
      %v2222 = vsel %vm229, %v2092, 0
      %v2225 = vsel %vm229, %v2097, 0
      %v2228 = vsel %vm229, %v2102, 0
      %v2231 = vsel %vm229, %v2107, 0
      %v2234 = vsel %vm229, %v2112, 0
      %v2237 = vsel %vm229, %v2117, 0
      %v2240 = vsel %vm229, %v2122, 0
      %v2243 = vsel %vm229, %v2127, 0
      %v2246 = vsel %vm229, %v2132, 0
      %v2249 = vsel %vm229, %v2137, 0
      %v2252 = vsel %vm229, %v2142, 0
      %v2255 = vsel %vm229, %v2147, 0
      %v2258 = vsel %vm229, %v2152, 0
      %v2261 = vsel %vm229, %v2157, 0
      %v2264 = vsel %vm229, %v2162, 0
      %v2267 = vsel %vm229, %v2167, 0
      %v2270 = vsel %vm229, %v2172, 0
      %v2273 = vsel %vm1946, %v2175, 0
      %2275 = vmatprep.subr.mxu0 0.0
      %2276 = vmatpush1.msra.mxu0 %v2273
      %2277 = vmatprep.subr.mxu0 0.0
      %2278 = vmatpush1.msra.mxu0 0.0
      %2279 = vmatprep.subr.mxu0 0.0
      %2280 = vmatpush1.msra.mxu0 0.0
      %2281 = vmatprep.subr.mxu0 0.0
      %2282 = vmatpush1.msra.mxu0 0.0
      %2283 = vmatprep.subr.mxu0 0.0
      %2284 = vmatpush1.msra.mxu0 0.0
      %2285 = vmatprep.subr.mxu0 0.0
      %2286 = vmatpush1.msra.mxu0 0.0
      %2287 = vmatprep.subr.mxu0 0.0
      %2288 = vmatpush1.msra.mxu0 0.0
      %2289 = vmatprep.subr.mxu0 0.0
      %2290 = vmatpush1.msra.mxu0 0.0
      %2291 = vmatprep.subr.mxu0 0.0
      %2292 = vmatpush1.msra.mxu0 0.0
      %2293 = vmatprep.subr.mxu0 0.0
      %2294 = vmatpush1.msra.mxu0 0.0
      %2295 = vmatprep.subr.mxu0 0.0
      %2296 = vmatpush1.msra.mxu0 0.0
      %2297 = vmatprep.subr.mxu0 0.0
      %2298 = vmatpush1.msra.mxu0 0.0
      %2299 = vmatprep.subr.mxu0 0.0
      %2300 = vmatpush1.msra.mxu0 0.0
      %2301 = vmatprep.subr.mxu0 0.0
      %2302 = vmatpush1.msra.mxu0 0.0
      %2303 = vmatprep.subr.mxu0 0.0
      %2304 = vmatpush1.msra.mxu0 0.0
      %2305 = vmatprep.subr.mxu0 0.0
      %2306 = vmatpush1.msra.mxu0 0.0
      %2307 = vmatprep.subr.mxu0 0.0
      %2308 = vmatpush1.msra.mxu0 0.0
      %2309 = vmatprep.subr.mxu0 0.0
      %2310 = vmatpush1.msra.mxu0 0.0
      %2311 = vmatprep.subr.mxu0 0.0
      %2312 = vmatpush1.msra.mxu0 0.0
      %2313 = vmatprep.subr.mxu0 0.0
      %2314 = vmatpush1.msra.mxu0 0.0
      %2315 = vmatprep.subr.mxu0 0.0
      %2316 = vmatpush1.msra.mxu0 0.0
      %2317 = vmatprep.subr.mxu0 0.0
      %2318 = vmatpush1.msra.mxu0 0.0
      %2319 = vmatprep.subr.mxu0 0.0
      %2320 = vmatpush1.msra.mxu0 0.0
      %2321 = vmatprep.subr.mxu0 0.0
      %2322 = vmatpush1.msra.mxu0 0.0
      %2323 = vmatprep.subr.mxu0 0.0
      %2324 = vmatpush1.msra.mxu0 0.0
      %2325 = vmatprep.subr.mxu0 0.0
      %2326 = vmatpush1.msra.mxu0 0.0
      %2327 = vmatprep.subr.mxu0 0.0
      %2328 = vmatpush1.msra.mxu0 0.0
      %2329 = vmatprep.subr.mxu0 0.0
      %2330 = vmatpush1.msra.mxu0 0.0
      %2331 = vmatprep.subr.mxu0 0.0
      %2332 = vmatpush1.msra.mxu0 0.0
      %2333 = vmatprep.subr.mxu0 0.0
      %2334 = vmatpush1.msra.mxu0 0.0
      %2335 = vmatprep.subr.mxu0 0.0
      %2336 = vmatpush1.msra.mxu0 0.0
      %2337 = vmatprep.subr.mxu0 0.0
      %2338 = vmatpush1.msra.mxu0 0.0
      %2339 = vmatprep.mubr.f32.mxu0 0.0
      %2340 = vmatmul.mubr.f32.gmra.mrb[0].mxu0 %v2177
      %v2341 = vpop.f32.mrb[0].mxu0
      %v2342 = vadd.f32 0.0, %v2341
      %v2343 = vpop.f32.mrb[0].mxu0
      %2344 = vmatprep.mubr.f32.mxu0 0.0
      %2345 = vmatmul.mubr.f32.gmra.mrb[0].mxu0 %v2180
      %v2346 = vpop.f32.mrb[0].mxu0
      %v2347 = vadd.f32 0.0, %v2346
      %v2348 = vpop.f32.mrb[0].mxu0
      %2349 = vmatprep.mubr.f32.mxu0 0.0
      %2350 = vmatmul.mubr.f32.gmra.mrb[0].mxu0 %v2183
      %v2351 = vpop.f32.mrb[0].mxu0
      %v2352 = vadd.f32 0.0, %v2351
      %v2353 = vpop.f32.mrb[0].mxu0
      %2354 = vmatprep.mubr.f32.mxu0 0.0
      %2355 = vmatmul.mubr.f32.gmra.mrb[0].mxu0 %v2186
      %v2356 = vpop.f32.mrb[0].mxu0
      %v2357 = vadd.f32 0.0, %v2356
      %v2358 = vpop.f32.mrb[0].mxu0
      %2359 = vmatprep.mubr.f32.mxu0 0.0
      %2360 = vmatmul.mubr.f32.gmra.mrb[0].mxu0 %v2189
      %v2361 = vpop.f32.mrb[0].mxu0
      %v2362 = vadd.f32 0.0, %v2361
      %v2363 = vpop.f32.mrb[0].mxu0
      %2364 = vmatprep.mubr.f32.mxu0 0.0
      %2365 = vmatmul.mubr.f32.gmra.mrb[0].mxu0 %v2192
      %v2366 = vpop.f32.mrb[0].mxu0
      %v2367 = vadd.f32 0.0, %v2366
      %v2368 = vpop.f32.mrb[0].mxu0
      %2369 = vmatprep.mubr.f32.mxu0 0.0
      %2370 = vmatmul.mubr.f32.gmra.mrb[0].mxu0 %v2195
      %v2371 = vpop.f32.mrb[0].mxu0
      %v2372 = vadd.f32 0.0, %v2371
      %v2373 = vpop.f32.mrb[0].mxu0
      %2374 = vmatprep.mubr.f32.mxu0 0.0
      %2375 = vmatmul.mubr.f32.gmra.mrb[0].mxu0 %v2198
      %v2376 = vpop.f32.mrb[0].mxu0
      %v2377 = vadd.f32 0.0, %v2376
      %v2378 = vpop.f32.mrb[0].mxu0
      %2379 = vmatprep.mubr.f32.mxu0 0.0
      %2380 = vmatmul.mubr.f32.gmra.mrb[0].mxu0 %v2201
      %v2381 = vpop.f32.mrb[0].mxu0
      %v2382 = vadd.f32 0.0, %v2381
      %v2383 = vpop.f32.mrb[0].mxu0
      %2384 = vmatprep.mubr.f32.mxu0 0.0
      %2385 = vmatmul.mubr.f32.gmra.mrb[0].mxu0 %v2204
      %v2386 = vpop.f32.mrb[0].mxu0
      %v2387 = vadd.f32 0.0, %v2386
      %v2388 = vpop.f32.mrb[0].mxu0
      %2389 = vmatprep.mubr.f32.mxu0 0.0
      %2390 = vmatmul.mubr.f32.gmra.mrb[0].mxu0 %v2207
      %v2391 = vpop.f32.mrb[0].mxu0
      %v2392 = vadd.f32 0.0, %v2391
      %v2393 = vpop.f32.mrb[0].mxu0
      %2394 = vmatprep.mubr.f32.mxu0 0.0
      %2395 = vmatmul.mubr.f32.gmra.mrb[0].mxu0 %v2210
      %v2396 = vpop.f32.mrb[0].mxu0
      %v2397 = vadd.f32 0.0, %v2396
      %v2398 = vpop.f32.mrb[0].mxu0
      %2399 = vmatprep.mubr.f32.mxu0 0.0
      %2400 = vmatmul.mubr.f32.gmra.mrb[0].mxu0 %v2213
      %v2401 = vpop.f32.mrb[0].mxu0
      %v2402 = vadd.f32 0.0, %v2401
      %v2403 = vpop.f32.mrb[0].mxu0
      %2404 = vmatprep.mubr.f32.mxu0 0.0
      %2405 = vmatmul.mubr.f32.gmra.mrb[0].mxu0 %v2216
      %v2406 = vpop.f32.mrb[0].mxu0
      %v2407 = vadd.f32 0.0, %v2406
      %v2408 = vpop.f32.mrb[0].mxu0
      %2409 = vmatprep.mubr.f32.mxu0 0.0
      %2410 = vmatmul.mubr.f32.gmra.mrb[0].mxu0 %v2219
      %v2411 = vpop.f32.mrb[0].mxu0
      %v2412 = vadd.f32 0.0, %v2411
      %v2413 = vpop.f32.mrb[0].mxu0
      %2414 = vmatprep.mubr.f32.mxu0 0.0
      %2415 = vmatmul.mubr.f32.gmra.mrb[0].mxu0 %v2222
      %v2416 = vpop.f32.mrb[0].mxu0
      %v2417 = vadd.f32 0.0, %v2416
      %v2418 = vpop.f32.mrb[0].mxu0
      %2419 = vmatprep.mubr.f32.mxu0 0.0
      %2420 = vmatmul.mubr.f32.gmra.mrb[0].mxu0 %v2225
      %v2421 = vpop.f32.mrb[0].mxu0
      %v2422 = vadd.f32 0.0, %v2421
      %v2423 = vpop.f32.mrb[0].mxu0
      %2424 = vmatprep.mubr.f32.mxu0 0.0
      %2425 = vmatmul.mubr.f32.gmra.mrb[0].mxu0 %v2228
      %v2426 = vpop.f32.mrb[0].mxu0
      %v2427 = vadd.f32 0.0, %v2426
      %v2428 = vpop.f32.mrb[0].mxu0
      %2429 = vmatprep.mubr.f32.mxu0 0.0
      %2430 = vmatmul.mubr.f32.gmra.mrb[0].mxu0 %v2231
      %v2431 = vpop.f32.mrb[0].mxu0
      %v2432 = vadd.f32 0.0, %v2431
      %v2433 = vpop.f32.mrb[0].mxu0
      %2434 = vmatprep.mubr.f32.mxu0 0.0
      %2435 = vmatmul.mubr.f32.gmra.mrb[0].mxu0 %v2234
      %v2436 = vpop.f32.mrb[0].mxu0
      %v2437 = vadd.f32 0.0, %v2436
      %v2438 = vpop.f32.mrb[0].mxu0
      %2439 = vmatprep.mubr.f32.mxu0 0.0
      %2440 = vmatmul.mubr.f32.gmra.mrb[0].mxu0 %v2237
      %v2441 = vpop.f32.mrb[0].mxu0
      %v2442 = vadd.f32 0.0, %v2441
      %v2443 = vpop.f32.mrb[0].mxu0
      %2444 = vmatprep.mubr.f32.mxu0 0.0
      %2445 = vmatmul.mubr.f32.gmra.mrb[0].mxu0 %v2240
      %v2446 = vpop.f32.mrb[0].mxu0
      %v2447 = vadd.f32 0.0, %v2446
      %v2448 = vpop.f32.mrb[0].mxu0
      %2449 = vmatprep.mubr.f32.mxu0 0.0
      %2450 = vmatmul.mubr.f32.gmra.mrb[0].mxu0 %v2243
      %v2451 = vpop.f32.mrb[0].mxu0
      %v2452 = vadd.f32 0.0, %v2451
      %v2453 = vpop.f32.mrb[0].mxu0
      %2454 = vmatprep.mubr.f32.mxu0 0.0
      %2455 = vmatmul.mubr.f32.gmra.mrb[0].mxu0 %v2246
      %v2456 = vpop.f32.mrb[0].mxu0
      %v2457 = vadd.f32 0.0, %v2456
      %v2458 = vpop.f32.mrb[0].mxu0
      %2459 = vmatprep.mubr.f32.mxu0 0.0
      %2460 = vmatmul.mubr.f32.gmra.mrb[0].mxu0 %v2249
      %v2461 = vpop.f32.mrb[0].mxu0
      %v2462 = vadd.f32 0.0, %v2461
      %v2463 = vpop.f32.mrb[0].mxu0
      %2464 = vmatprep.mubr.f32.mxu0 0.0
      %2465 = vmatmul.mubr.f32.gmra.mrb[0].mxu0 %v2252
      %v2466 = vpop.f32.mrb[0].mxu0
      %v2467 = vadd.f32 0.0, %v2466
      %v2468 = vpop.f32.mrb[0].mxu0
      %2469 = vmatprep.mubr.f32.mxu0 0.0
      %2470 = vmatmul.mubr.f32.gmra.mrb[0].mxu0 %v2255
      %v2471 = vpop.f32.mrb[0].mxu0
      %v2472 = vadd.f32 0.0, %v2471
      %v2473 = vpop.f32.mrb[0].mxu0
      %2474 = vmatprep.mubr.f32.mxu0 0.0
      %2475 = vmatmul.mubr.f32.gmra.mrb[0].mxu0 %v2258
      %v2476 = vpop.f32.mrb[0].mxu0
      %v2477 = vadd.f32 0.0, %v2476
      %v2478 = vpop.f32.mrb[0].mxu0
      %2479 = vmatprep.mubr.f32.mxu0 0.0
      %2480 = vmatmul.mubr.f32.gmra.mrb[0].mxu0 %v2261
      %v2481 = vpop.f32.mrb[0].mxu0
      %v2482 = vadd.f32 0.0, %v2481
      %v2483 = vpop.f32.mrb[0].mxu0
      %2484 = vmatprep.mubr.f32.mxu0 0.0
      %2485 = vmatmul.mubr.f32.gmra.mrb[0].mxu0 %v2264
      %v2486 = vpop.f32.mrb[0].mxu0
      %v2487 = vadd.f32 0.0, %v2486
      %v2488 = vpop.f32.mrb[0].mxu0
      %2489 = vmatprep.mubr.f32.mxu0 0.0
      %2490 = vmatmul.mubr.f32.gmra.mrb[0].mxu0 %v2267
      %v2491 = vpop.f32.mrb[0].mxu0
      %v2492 = vadd.f32 0.0, %v2491
      %v2493 = vpop.f32.mrb[0].mxu0
      %2494 = vmatprep.mubr.f32.mxu0 0.0
      %2495 = vmatmul.mubr.f32.gmra.mrb[0].mxu0 %v2270
      %v2496 = vpop.f32.mrb[0].mxu0
      %v2497 = vadd.f32 0.0, %v2496
      %v2498 = vpop.f32.mrb[0].mxu0
      %2499 = vdwg.mxu0
      %vm2500 = vcmask 64512
      %2501 = vst.msk [vmem:[%s192] sm:$0xff] %vm2500, %v2342
      %2502 = vst.msk [vmem:[%s192 + $0x8] sm:$0xff] %vm2500, %v2347
      %2503 = vst.msk [vmem:[%s192 + $0x10] sm:$0xff] %vm2500, %v2352
      %2504 = vst.msk [vmem:[%s192 + $0x18] sm:$0xff] %vm2500, %v2357
      %2505 = vst.msk [vmem:[%s192 + $0x20] sm:$0xff] %vm2500, %v2362
      %2506 = vst.msk [vmem:[%s192 + $0x28] sm:$0xff] %vm2500, %v2367
      %2507 = vst.msk [vmem:[%s192 + $0x30] sm:$0xff] %vm2500, %v2372
      %2508 = vst.msk [vmem:[%s192 + $0x38] sm:$0xff] %vm2500, %v2377
      %2509 = vst.msk [vmem:[%s192 + $0x40] sm:$0xff] %vm2500, %v2382
      %2510 = vst.msk [vmem:[%s192 + $0x48] sm:$0xff] %vm2500, %v2387
      %2511 = vst.msk [vmem:[%s192 + $0x50] sm:$0xff] %vm2500, %v2392
      %2512 = vst.msk [vmem:[%s192 + $0x58] sm:$0xff] %vm2500, %v2397
      %2513 = vst.msk [vmem:[%s192 + $0x60] sm:$0xff] %vm2500, %v2402
      %2514 = vst.msk [vmem:[%s192 + $0x68] sm:$0xff] %vm2500, %v2407
      %2515 = vst.msk [vmem:[%s192 + $0x70] sm:$0xff] %vm2500, %v2412
      %2516 = vst.msk [vmem:[%s192 + $0x78] sm:$0xff] %vm2500, %v2417
      %2517 = vst.msk [vmem:[%s192 + $0x80] sm:$0xff] %vm2500, %v2422
      %2518 = vst.msk [vmem:[%s192 + $0x88] sm:$0xff] %vm2500, %v2427
      %2519 = vst.msk [vmem:[%s192 + $0x90] sm:$0xff] %vm2500, %v2432
      %2520 = vst.msk [vmem:[%s192 + $0x98] sm:$0xff] %vm2500, %v2437
      %2521 = vst.msk [vmem:[%s192 + $0xa0] sm:$0xff] %vm2500, %v2442
      %2522 = vst.msk [vmem:[%s192 + $0xa8] sm:$0xff] %vm2500, %v2447
      %2523 = vst.msk [vmem:[%s192 + $0xb0] sm:$0xff] %vm2500, %v2452
      %2524 = vst.msk [vmem:[%s192 + $0xb8] sm:$0xff] %vm2500, %v2457
      %2525 = vst.msk [vmem:[%s192 + $0xc0] sm:$0xff] %vm2500, %v2462
      %2526 = vst.msk [vmem:[%s192 + $0xc8] sm:$0xff] %vm2500, %v2467
      %2527 = vst.msk [vmem:[%s192 + $0xd0] sm:$0xff] %vm2500, %v2472
      %2528 = vst.msk [vmem:[%s192 + $0xd8] sm:$0xff] %vm2500, %v2477
      %2529 = vst.msk [vmem:[%s192 + $0xe0] sm:$0xff] %vm2500, %v2482
      %2530 = vst.msk [vmem:[%s192 + $0xe8] sm:$0xff] %vm2500, %v2487
      %2531 = vst.msk [vmem:[%s192 + $0xf0] sm:$0xff] %vm2500, %v2492
      %2532 = vst.msk [vmem:[%s192 + $0xf8] sm:$0xff] %vm2500, %v2497
      %s2533 = smul.u32 32, %s19
      %p2534 = scmp.lt.s32.totalorder %s18, 1
      %s2535 = scalar_select %p2534, %s18, 1
      %p2536 = scmp.lt.s32.totalorder %s2533, 31
      %s2537 = scalar_select %p2536, %s2533, 31
      %s2538 = smul.addr %s2535, 32
      %s2539 = sadd.s32 %s2537, %s2538
      %s2540 = smul.addr %s2539, 8
      %s2541 = scalar_lea.vmem %s3, %s2540
      // Predicated region
      $region33: #{tpu_custom_call.1} parent=31 // pred_check
        %p2542 = pneg %p114
      $region34: #{tpu_custom_call.1} parent=31 // pred_check_branch
        %2544 = sbr.rel (%p2542) target = $region36
      $region35: #{tpu_custom_call.1} parent=31 // pred_region
        %s2545 = smul.u32 32, %s19
      $region36: #{tpu_custom_call.1} parent=31 // pred_fallthru
        _
    $region32: #{tpu_custom_call.1} parent=5 // pred_fallthru
      _
    %p2546 = scmp.le.s32.totalorder 2, %s9
    // Predicated region
    $region37: #{tpu_custom_call.1} parent=5 // pred_check
      %p2547 = pneg %p2546
    $region38: #{tpu_custom_call.1} parent=5 // pred_check_branch
      %2549 = sbr.rel (%p2547) target = $region40
    $region39: #{tpu_custom_call.1} parent=5 // pred_region
      %s2550 = ssub.s32 %s9, 2
      // Predicated region
      $region41: #{tpu_custom_call.1} parent=39 // pred_check
        %p2551 = pneg %p120
      $region42: #{tpu_custom_call.1} parent=39 // pred_check_branch
        %2553 = sbr.rel (%p2551) target = $region44
      $region43: #{tpu_custom_call.1} parent=39 // pred_region
        %s2554 = smul.u32 32, %s21
        %p2555 = scmp.lt.s32.totalorder %s20, 1
        %s2556 = scalar_select %p2555, %s20, 1
        %p2557 = scmp.lt.s32.totalorder %s2554, 31
        %s2558 = scalar_select %p2557, %s2554, 31
        %s2559 = smul.addr %s2556, 32
        %s2560 = sadd.s32 %s2558, %s2559
        %s2561 = smul.addr %s2560, 8
        %s2562 = scalar_lea.vmem %s3, %s2561
      $region44: #{tpu_custom_call.1} parent=39 // pred_fallthru
        _
    $region40: #{tpu_custom_call.1} parent=5 // pred_fallthru
      _
  $region6: #{tpu_custom_call.1} parent=0 // loop_footer
    %s13 = sadd.s32 1, %s9
  $region7: #{tpu_custom_call.1} parent=0 // loop_footer_branch
    %8 = sbr.rel target = $region3
  $region8: #{tpu_custom_call.1} parent=0 // loop_exit
    _

</llo_original>
